<compile_context>
chip_gen: v6e
topology: v6e:2x2x1
jax: 0.10.0
libtpu: 0.0.40
codegen_flags: <defaults>
</compile_context>

<pallas_src>
import math
from functools import partial

import jax
import jax.numpy as jnp
from jax import lax
from jax.experimental import pallas as pl
from jax.experimental.pallas import tpu as pltpu


def _pick_block(n, target):
    """Largest divisor of n that is <= target, preferring lane/sublane aligned sizes."""
    if n <= target:
        return n
    divisors = [d for d in range(1, target + 1) if n % d == 0]
    for align in (128, 8, 1):
        aligned = [d for d in divisors if d % align == 0]
        if aligned:
            return max(aligned)
    return n


def _flash_cross_attn_kernel(q_ref, k_ref, v_ref, o_ref, m_sc, l_sc, acc_sc,
                             *, scale, causal):
    # q_ref: (1, tq, H, D)   k_ref/v_ref: (1, tk, 1, H, D)   o_ref: (1, tq, H, D)
    # m_sc/l_sc: (H, tq, 1) f32   acc_sc: (H, tq, D) f32
    qi = pl.program_id(1)
    ki = pl.program_id(2)
    nk = pl.num_programs(2)

    tq = q_ref.shape[1]
    tk = k_ref.shape[1]
    num_heads = q_ref.shape[2]
    mask_value = jnp.float32(-1e30)

    @pl.when(ki == 0)
    def _init():
        m_sc[...] = jnp.full(m_sc.shape, -jnp.inf, dtype=m_sc.dtype)
        l_sc[...] = jnp.zeros(l_sc.shape, dtype=l_sc.dtype)
        acc_sc[...] = jnp.zeros(acc_sc.shape, dtype=acc_sc.dtype)

    def _update():
        if causal:
            # Global positions for this (qi, ki) tile; mask computed once for all heads.
            row = qi * tq + lax.broadcasted_iota(jnp.int32, (tq, tk), 0)
            col = ki * tk + lax.broadcasted_iota(jnp.int32, (tq, tk), 1)
            keep = col <= row  # top-left aligned, matches torch.triu(full(-1e4), 1)

        # Static unroll over heads (H is a small trace-time constant).
        for h in range(num_heads):
            q = q_ref[0, :, h, :] * scale      # (tq, D), stays in input dtype
            k = k_ref[0, :, 0, h, :]           # (tk, D)
            v = v_ref[0, :, 0, h, :]           # (tk, D)

            # Contract D on both operands directly on the MXU (no transpose).
            s = lax.dot_general(q, k, (((1,), (1,)), ((), ())),
                                preferred_element_type=jnp.float32)  # (tq, tk) f32
            if causal:
                s = jnp.where(keep, s, mask_value)

            # Online softmax update (all state in f32).
            m_prev = m_sc[h]                                   # (tq, 1)
            m_new = jnp.maximum(m_prev, jnp.max(s, axis=-1, keepdims=True))
            alpha = jnp.exp(m_prev - m_new)
            p = jnp.exp(s - m_new)
            l_sc[h] = alpha * l_sc[h] + jnp.sum(p, axis=-1, keepdims=True)
            acc_sc[h] = alpha * acc_sc[h] + jnp.dot(
                p.astype(v.dtype), v, preferred_element_type=jnp.float32)
            m_sc[h] = m_new

    if causal:
        # Skip kv blocks that lie entirely above the diagonal.
        pl.when(ki * tk <= qi * tq + (tq - 1))(_update)
    else:
        _update()

    @pl.when(ki == nk - 1)
    def _finalize():
        for h in range(num_heads):
            # Exact reciprocal: finalize runs once per q-block so the cost is
            # negligible and it keeps the output bit-close to the reference.
            inv_l = pl.reciprocal(l_sc[h], approx=False)
            o_ref[0, :, h, :] = (acc_sc[h] * inv_l).astype(o_ref.dtype)


def cross_attention(q, kv, *, causal=False, softmax_scale=None,
                    block_q=256, block_k=512, vmem_limit_bytes=64 * 1024 * 1024):
    """q: (B, Sq, H, D), kv: (B, Sk, 2, H, D) -> (B, Sq, H, D)."""
    B, Sq, H, D = q.shape
    assert (kv.shape[0] == B and kv.shape[2] == 2
            and kv.shape[3] == H and kv.shape[4] == D)
    Sk = kv.shape[1]
    scale = softmax_scale if softmax_scale is not None else 1.0 / math.sqrt(D)

    tq = _pick_block(Sq, block_q)
    tk = _pick_block(Sk, block_k)
    nq = Sq // tq
    nk = Sk // tk

    kernel = partial(_flash_cross_attn_kernel, scale=scale, causal=causal)

    itemsize = jnp.dtype(q.dtype).itemsize
    cost = pl.CostEstimate(
        flops=4 * B * H * Sq * Sk * D,              # QK^T + PV
        transcendentals=B * H * Sq * Sk,            # exp in the online softmax
        bytes_accessed=(q.size + kv.size + q.size) * itemsize,
    )

    out = pl.pallas_call(
        kernel,
        out_shape=jax.ShapeDtypeStruct((B, Sq, H, D), q.dtype),
        grid_spec=pltpu.PrefetchScalarGridSpec(
            num_scalar_prefetch=0,
            grid=(B, nq, nk),
            in_specs=[
                # q in native layout; block independent of the kv axis -> stays resident.
                pl.BlockSpec((1, tq, H, D), lambda b, qi, ki: (b, qi, 0, 0)),
                # K and V: same kv array, index_map picks slot 0 / 1 on the "2" axis.
                pl.BlockSpec((1, tk, 1, H, D), lambda b, qi, ki: (b, ki, 0, 0, 0)),
                pl.BlockSpec((1, tk, 1, H, D), lambda b, qi, ki: (b, ki, 1, 0, 0)),
            ],
            out_specs=pl.BlockSpec((1, tq, H, D), lambda b, qi, ki: (b, qi, 0, 0)),
            scratch_shapes=[
                pltpu.VMEM((H, tq, 1), jnp.float32),   # running max m
                pltpu.VMEM((H, tq, 1), jnp.float32),   # running sum l
                pltpu.VMEM((H, tq, D), jnp.float32),   # output accumulator
            ],
        ),
        compiler_params=pltpu.CompilerParams(
            dimension_semantics=("parallel", "parallel", "arbitrary"),
            vmem_limit_bytes=vmem_limit_bytes,
        ),
        cost_estimate=cost,
    )(q, kv, kv)
    return out


def cross_attention_ref(q, kv, *, causal=False, softmax_scale=None):
    """Pure-JAX reference mirroring the PyTorch module."""
    D = q.shape[-1]
    scale = softmax_scale if softmax_scale is not None else 1.0 / math.sqrt(D)
    k = kv[:, :, 0]
    v = kv[:, :, 1]
    scores = jnp.einsum("bthd,bshd->bhts", q, k * scale)
    if causal:
        sq, sk = scores.shape[-2], scores.shape[-1]
        mask = jnp.triu(jnp.full((sq, sk), -10000.0, dtype=scores.dtype), 1)
        scores = scores + mask
    attn = jax.nn.softmax(scores, axis=-1)
    return jnp.einsum("bhts,bshd->bthd", attn, v)


if __name__ == "__main__":
    key = jax.random.PRNGKey(0)
    B, Sq, Sk, H, D = 2, 8, 8, 4, 32
    kq, kkv = jax.random.split(key)
    q = jax.random.normal(kq, (B, Sq, H, D), dtype=jnp.float32)
    kv = jax.random.normal(kkv, (B, Sk, 2, H, D), dtype=jnp.float32)

    # Non-causal
    out = jax.block_until_ready(cross_attention(q, kv, causal=False))
    ref = cross_attention_ref(q, kv, causal=False)
    assert out.shape == (B, Sq, H, D)
    assert jnp.allclose(out, ref, atol=2e-5, rtol=2e-5), "non-causal mismatch vs reference"

    # Causal
    out_c = jax.block_until_ready(cross_attention(q, kv, causal=True))
    ref_c = cross_attention_ref(q, kv, causal=True)
    assert jnp.allclose(out_c, ref_c, atol=2e-5, rtol=2e-5), "causal mismatch vs reference"

    print("KERNEL_OK")
</pallas_src>

<mosaic_0001>
module attributes {stable_mosaic.version = 11 : i64} {
  func.func @_flash_cross_attn_kernel(%arg0: i32, %arg1: i32, %arg2: i32, %arg3: memref<1x8x4x32xf32, #tpu.memory_space<vmem>>, %arg4: memref<1x8x1x4x32xf32, #tpu.memory_space<vmem>>, %arg5: memref<1x8x1x4x32xf32, #tpu.memory_space<vmem>>, %arg6: memref<1x8x4x32xf32, #tpu.memory_space<vmem>>, %arg7: memref<4x8x1xf32, #tpu.memory_space<vmem>>, %arg8: memref<4x8x1xf32, #tpu.memory_space<vmem>>, %arg9: memref<4x8x32xf32, #tpu.memory_space<vmem>>) attributes {dimension_semantics = [#tpu.dimension_semantics<parallel>, #tpu.dimension_semantics<parallel>, #tpu.dimension_semantics<arbitrary>], iteration_bounds = array<i64: 2, 1, 1>, scalar_prefetch = 0 : i64, scratch_operands = 3 : i64, tpu.core_type = #tpu.core_type<tc>, window_params = [{transform_indices = @transform_0, window_bounds = array<i64: 1, 8, 4, 32>}, {transform_indices = @transform_1, window_bounds = array<i64: 1, 8, 1, 4, 32>}, {transform_indices = @transform_2, window_bounds = array<i64: 1, 8, 1, 4, 32>}, {transform_indices = @transform_3, window_bounds = array<i64: 1, 8, 4, 32>}]} {
    %c0_i32 = arith.constant 0 : i32
    %0 = arith.cmpi eq, %arg2, %c0_i32 : i32
    %1 = arith.extui %0 : i1 to i32
    %c0_i32_0 = arith.constant 0 : i32
    %2 = arith.cmpi ne, %1, %c0_i32_0 : i32
    scf.if %2 {
      %cst_146 = arith.constant 0xFF800000 : f32
      %166 = vector.broadcast %cst_146 : f32 to vector<4x8x1xf32>
      %c0_147 = arith.constant 0 : index
      %c0_148 = arith.constant 0 : index
      %c0_149 = arith.constant 0 : index
      %167 = vector.load %arg7[%c0_147, %c0_148, %c0_149] : memref<4x8x1xf32, #tpu.memory_space<vmem>>, vector<4x8x1xf32>
      tpu.vector_store %arg7[%c0_147, %c0_148, %c0_149], %166 {strides = array<i32>} : memref<4x8x1xf32, #tpu.memory_space<vmem>>, vector<4x8x1xf32>,
      %cst_150 = arith.constant 0.000000e+00 : f32
      %168 = vector.broadcast %cst_150 : f32 to vector<4x8x1xf32>
      %c0_151 = arith.constant 0 : index
      %c0_152 = arith.constant 0 : index
      %c0_153 = arith.constant 0 : index
      %169 = vector.load %arg8[%c0_151, %c0_152, %c0_153] : memref<4x8x1xf32, #tpu.memory_space<vmem>>, vector<4x8x1xf32>
      tpu.vector_store %arg8[%c0_151, %c0_152, %c0_153], %168 {strides = array<i32>} : memref<4x8x1xf32, #tpu.memory_space<vmem>>, vector<4x8x1xf32>,
      %cst_154 = arith.constant 0.000000e+00 : f32
      %170 = vector.broadcast %cst_154 : f32 to vector<4x8x32xf32>
      %c0_155 = arith.constant 0 : index
      %c0_156 = arith.constant 0 : index
      %c0_157 = arith.constant 0 : index
      %171 = vector.load %arg9[%c0_155, %c0_156, %c0_157] : memref<4x8x32xf32, #tpu.memory_space<vmem>>, vector<4x8x32xf32>
      tpu.vector_store %arg9[%c0_155, %c0_156, %c0_157], %170 {strides = array<i32>} : memref<4x8x32xf32, #tpu.memory_space<vmem>>, vector<4x8x32xf32>,
    } else {
    }
    %c0 = arith.constant 0 : index
    %c0_1 = arith.constant 0 : index
    %c0_2 = arith.constant 0 : index
    %c0_3 = arith.constant 0 : index
    %3 = vector.load %arg3[%c0, %c0_1, %c0_2, %c0_3] : memref<1x8x4x32xf32, #tpu.memory_space<vmem>>, vector<1x8x1x32xf32>
    %4 = vector.shape_cast %3 : vector<1x8x1x32xf32> to vector<8x32xf32>
    %cst = arith.constant 0.176776692 : f32
    %5 = vector.broadcast %cst : f32 to vector<8x32xf32>
    %6 = arith.mulf %4, %5 : vector<8x32xf32>
    %c0_4 = arith.constant 0 : index
    %c0_5 = arith.constant 0 : index
    %c0_6 = arith.constant 0 : index
    %c0_7 = arith.constant 0 : index
    %c0_8 = arith.constant 0 : index
    %7 = vector.load %arg4[%c0_4, %c0_5, %c0_6, %c0_7, %c0_8] : memref<1x8x1x4x32xf32, #tpu.memory_space<vmem>>, vector<1x8x1x1x32xf32>
    %8 = vector.shape_cast %7 : vector<1x8x1x1x32xf32> to vector<8x32xf32>
    %c0_9 = arith.constant 0 : index
    %c0_10 = arith.constant 0 : index
    %c0_11 = arith.constant 0 : index
    %c0_12 = arith.constant 0 : index
    %c0_13 = arith.constant 0 : index
    %9 = vector.load %arg5[%c0_9, %c0_10, %c0_11, %c0_12, %c0_13] : memref<1x8x1x4x32xf32, #tpu.memory_space<vmem>>, vector<1x8x1x1x32xf32>
    %10 = vector.shape_cast %9 : vector<1x8x1x1x32xf32> to vector<8x32xf32>
    %cst_14 = arith.constant dense<0.000000e+00> : vector<8x8xf32>
    %11 = tpu.matmul %6, %8, %cst_14 {dimension_numbers = #tpu.dot_dimension_numbers<[1], [1], [0], [0], [0, 0, 1, 0], [], []>} : vector<8x32xf32>, vector<8x32xf32>, vector<8x8xf32> -> vector<8x8xf32>
    %c0_15 = arith.constant 0 : index
    %c0_16 = arith.constant 0 : index
    %c0_17 = arith.constant 0 : index
    %12 = vector.load %arg7[%c0_15, %c0_16, %c0_17] : memref<4x8x1xf32, #tpu.memory_space<vmem>>, vector<1x8x1xf32>
    %13 = vector.shape_cast %12 : vector<1x8x1xf32> to vector<8x1xf32>
    %cst_18 = arith.constant dense<0xFF800000> : vector<8xf32>
    %14 = vector.multi_reduction <maximumf>, %11, %cst_18 [1] : vector<8x8xf32> to vector<8xf32>
    %15 = vector.shape_cast %14 : vector<8xf32> to vector<8x1xf32>
    %16 = arith.maximumf %13, %15 : vector<8x1xf32>
    %17 = arith.subf %13, %16 : vector<8x1xf32>
    %18 = math.exp %17 : vector<8x1xf32>
    %19 = vector.broadcast %16 : vector<8x1xf32> to vector<8x8xf32>
    %20 = arith.subf %11, %19 : vector<8x8xf32>
    %21 = math.exp %20 : vector<8x8xf32>
    %c0_19 = arith.constant 0 : index
    %c0_20 = arith.constant 0 : index
    %c0_21 = arith.constant 0 : index
    %22 = vector.load %arg8[%c0_19, %c0_20, %c0_21] : memref<4x8x1xf32, #tpu.memory_space<vmem>>, vector<1x8x1xf32>
    %23 = vector.shape_cast %22 : vector<1x8x1xf32> to vector<8x1xf32>
    %24 = arith.mulf %18, %23 : vector<8x1xf32>
    %cst_22 = arith.constant dense<0.000000e+00> : vector<8xf32>
    %25 = vector.multi_reduction <add>, %21, %cst_22 [1] : vector<8x8xf32> to vector<8xf32>
    %26 = vector.shape_cast %25 : vector<8xf32> to vector<8x1xf32>
    %27 = arith.addf %24, %26 : vector<8x1xf32>
    %c0_23 = arith.constant 0 : index
    %c0_24 = arith.constant 0 : index
    %c0_25 = arith.constant 0 : index
    %28 = vector.load %arg8[%c0_23, %c0_24, %c0_25] : memref<4x8x1xf32, #tpu.memory_space<vmem>>, vector<1x8x1xf32>
    %29 = vector.shape_cast %28 : vector<1x8x1xf32> to vector<8x1xf32>
    %30 = vector.shape_cast %27 : vector<8x1xf32> to vector<1x8x1xf32>
    tpu.vector_store %arg8[%c0_23, %c0_24, %c0_25], %30 {strides = array<i32>} : memref<4x8x1xf32, #tpu.memory_space<vmem>>, vector<1x8x1xf32>,
    %c0_26 = arith.constant 0 : index
    %c0_27 = arith.constant 0 : index
    %c0_28 = arith.constant 0 : index
    %31 = vector.load %arg9[%c0_26, %c0_27, %c0_28] : memref<4x8x32xf32, #tpu.memory_space<vmem>>, vector<1x8x32xf32>
    %32 = vector.shape_cast %31 : vector<1x8x32xf32> to vector<8x32xf32>
    %33 = vector.broadcast %18 : vector<8x1xf32> to vector<8x32xf32>
    %34 = arith.mulf %33, %32 : vector<8x32xf32>
    %cst_29 = arith.constant dense<0.000000e+00> : vector<8x32xf32>
    %35 = tpu.matmul %21, %10, %cst_29 {dimension_numbers = #tpu.dot_dimension_numbers<[1], [0], [0], [1], [0, 0, 1, 1], [], []>} : vector<8x8xf32>, vector<8x32xf32>, vector<8x32xf32> -> vector<8x32xf32>
    %36 = arith.addf %34, %35 : vector<8x32xf32>
    %c0_30 = arith.constant 0 : index
    %c0_31 = arith.constant 0 : index
    %c0_32 = arith.constant 0 : index
    %37 = vector.load %arg9[%c0_30, %c0_31, %c0_32] : memref<4x8x32xf32, #tpu.memory_space<vmem>>, vector<1x8x32xf32>
    %38 = vector.shape_cast %37 : vector<1x8x32xf32> to vector<8x32xf32>
    %39 = vector.shape_cast %36 : vector<8x32xf32> to vector<1x8x32xf32>
    tpu.vector_store %arg9[%c0_30, %c0_31, %c0_32], %39 {strides = array<i32>} : memref<4x8x32xf32, #tpu.memory_space<vmem>>, vector<1x8x32xf32>,
    %c0_33 = arith.constant 0 : index
    %c0_34 = arith.constant 0 : index
    %c0_35 = arith.constant 0 : index
    %40 = vector.load %arg7[%c0_33, %c0_34, %c0_35] : memref<4x8x1xf32, #tpu.memory_space<vmem>>, vector<1x8x1xf32>
    %41 = vector.shape_cast %40 : vector<1x8x1xf32> to vector<8x1xf32>
    %42 = vector.shape_cast %16 : vector<8x1xf32> to vector<1x8x1xf32>
    tpu.vector_store %arg7[%c0_33, %c0_34, %c0_35], %42 {strides = array<i32>} : memref<4x8x1xf32, #tpu.memory_space<vmem>>, vector<1x8x1xf32>,
    %c0_36 = arith.constant 0 : index
    %c0_37 = arith.constant 0 : index
    %c1 = arith.constant 1 : index
    %c0_38 = arith.constant 0 : index
    %43 = vector.load %arg3[%c0_36, %c0_37, %c1, %c0_38] : memref<1x8x4x32xf32, #tpu.memory_space<vmem>>, vector<1x8x1x32xf32>
    %44 = vector.shape_cast %43 : vector<1x8x1x32xf32> to vector<8x32xf32>
    %cst_39 = arith.constant 0.176776692 : f32
    %45 = vector.broadcast %cst_39 : f32 to vector<8x32xf32>
    %46 = arith.mulf %44, %45 : vector<8x32xf32>
    %c0_40 = arith.constant 0 : index
    %c0_41 = arith.constant 0 : index
    %c0_42 = arith.constant 0 : index
    %c1_43 = arith.constant 1 : index
    %c0_44 = arith.constant 0 : index
    %47 = vector.load %arg4[%c0_40, %c0_41, %c0_42, %c1_43, %c0_44] : memref<1x8x1x4x32xf32, #tpu.memory_space<vmem>>, vector<1x8x1x1x32xf32>
    %48 = vector.shape_cast %47 : vector<1x8x1x1x32xf32> to vector<8x32xf32>
    %c0_45 = arith.constant 0 : index
    %c0_46 = arith.constant 0 : index
    %c0_47 = arith.constant 0 : index
    %c1_48 = arith.constant 1 : index
    %c0_49 = arith.constant 0 : index
    %49 = vector.load %arg5[%c0_45, %c0_46, %c0_47, %c1_48, %c0_49] : memref<1x8x1x4x32xf32, #tpu.memory_space<vmem>>, vector<1x8x1x1x32xf32>
    %50 = vector.shape_cast %49 : vector<1x8x1x1x32xf32> to vector<8x32xf32>
    %cst_50 = arith.constant dense<0.000000e+00> : vector<8x8xf32>
    %51 = tpu.matmul %46, %48, %cst_50 {dimension_numbers = #tpu.dot_dimension_numbers<[1], [1], [0], [0], [0, 0, 1, 0], [], []>} : vector<8x32xf32>, vector<8x32xf32>, vector<8x8xf32> -> vector<8x8xf32>
    %c1_51 = arith.constant 1 : index
    %c0_52 = arith.constant 0 : index
    %c0_53 = arith.constant 0 : index
    %52 = vector.load %arg7[%c1_51, %c0_52, %c0_53] : memref<4x8x1xf32, #tpu.memory_space<vmem>>, vector<1x8x1xf32>
    %53 = vector.shape_cast %52 : vector<1x8x1xf32> to vector<8x1xf32>
    %cst_54 = arith.constant dense<0xFF800000> : vector<8xf32>
    %54 = vector.multi_reduction <maximumf>, %51, %cst_54 [1] : vector<8x8xf32> to vector<8xf32>
    %55 = vector.shape_cast %54 : vector<8xf32> to vector<8x1xf32>
    %56 = arith.maximumf %53, %55 : vector<8x1xf32>
    %57 = arith.subf %53, %56 : vector<8x1xf32>
    %58 = math.exp %57 : vector<8x1xf32>
    %59 = vector.broadcast %56 : vector<8x1xf32> to vector<8x8xf32>
    %60 = arith.subf %51, %59 : vector<8x8xf32>
    %61 = math.exp %60 : vector<8x8xf32>
    %c1_55 = arith.constant 1 : index
    %c0_56 = arith.constant 0 : index
    %c0_57 = arith.constant 0 : index
    %62 = vector.load %arg8[%c1_55, %c0_56, %c0_57] : memref<4x8x1xf32, #tpu.memory_space<vmem>>, vector<1x8x1xf32>
    %63 = vector.shape_cast %62 : vector<1x8x1xf32> to vector<8x1xf32>
    %64 = arith.mulf %58, %63 : vector<8x1xf32>
    %cst_58 = arith.constant dense<0.000000e+00> : vector<8xf32>
    %65 = vector.multi_reduction <add>, %61, %cst_58 [1] : vector<8x8xf32> to vector<8xf32>
    %66 = vector.shape_cast %65 : vector<8xf32> to vector<8x1xf32>
    %67 = arith.addf %64, %66 : vector<8x1xf32>
    %c1_59 = arith.constant 1 : index
    %c0_60 = arith.constant 0 : index
    %c0_61 = arith.constant 0 : index
    %68 = vector.load %arg8[%c1_59, %c0_60, %c0_61] : memref<4x8x1xf32, #tpu.memory_space<vmem>>, vector<1x8x1xf32>
    %69 = vector.shape_cast %68 : vector<1x8x1xf32> to vector<8x1xf32>
    %70 = vector.shape_cast %67 : vector<8x1xf32> to vector<1x8x1xf32>
    tpu.vector_store %arg8[%c1_59, %c0_60, %c0_61], %70 {strides = array<i32>} : memref<4x8x1xf32, #tpu.memory_space<vmem>>, vector<1x8x1xf32>,
    %c1_62 = arith.constant 1 : index
    %c0_63 = arith.constant 0 : index
    %c0_64 = arith.constant 0 : index
    %71 = vector.load %arg9[%c1_62, %c0_63, %c0_64] : memref<4x8x32xf32, #tpu.memory_space<vmem>>, vector<1x8x32xf32>
    %72 = vector.shape_cast %71 : vector<1x8x32xf32> to vector<8x32xf32>
    %73 = vector.broadcast %58 : vector<8x1xf32> to vector<8x32xf32>
    %74 = arith.mulf %73, %72 : vector<8x32xf32>
    %cst_65 = arith.constant dense<0.000000e+00> : vector<8x32xf32>
    %75 = tpu.matmul %61, %50, %cst_65 {dimension_numbers = #tpu.dot_dimension_numbers<[1], [0], [0], [1], [0, 0, 1, 1], [], []>} : vector<8x8xf32>, vector<8x32xf32>, vector<8x32xf32> -> vector<8x32xf32>
    %76 = arith.addf %74, %75 : vector<8x32xf32>
    %c1_66 = arith.constant 1 : index
    %c0_67 = arith.constant 0 : index
    %c0_68 = arith.constant 0 : index
    %77 = vector.load %arg9[%c1_66, %c0_67, %c0_68] : memref<4x8x32xf32, #tpu.memory_space<vmem>>, vector<1x8x32xf32>
    %78 = vector.shape_cast %77 : vector<1x8x32xf32> to vector<8x32xf32>
    %79 = vector.shape_cast %76 : vector<8x32xf32> to vector<1x8x32xf32>
    tpu.vector_store %arg9[%c1_66, %c0_67, %c0_68], %79 {strides = array<i32>} : memref<4x8x32xf32, #tpu.memory_space<vmem>>, vector<1x8x32xf32>,
    %c1_69 = arith.constant 1 : index
    %c0_70 = arith.constant 0 : index
    %c0_71 = arith.constant 0 : index
    %80 = vector.load %arg7[%c1_69, %c0_70, %c0_71] : memref<4x8x1xf32, #tpu.memory_space<vmem>>, vector<1x8x1xf32>
    %81 = vector.shape_cast %80 : vector<1x8x1xf32> to vector<8x1xf32>
    %82 = vector.shape_cast %56 : vector<8x1xf32> to vector<1x8x1xf32>
    tpu.vector_store %arg7[%c1_69, %c0_70, %c0_71], %82 {strides = array<i32>} : memref<4x8x1xf32, #tpu.memory_space<vmem>>, vector<1x8x1xf32>,
    %c0_72 = arith.constant 0 : index
    %c0_73 = arith.constant 0 : index
    %c2 = arith.constant 2 : index
    %c0_74 = arith.constant 0 : index
    %83 = vector.load %arg3[%c0_72, %c0_73, %c2, %c0_74] : memref<1x8x4x32xf32, #tpu.memory_space<vmem>>, vector<1x8x1x32xf32>
    %84 = vector.shape_cast %83 : vector<1x8x1x32xf32> to vector<8x32xf32>
    %cst_75 = arith.constant 0.176776692 : f32
    %85 = vector.broadcast %cst_75 : f32 to vector<8x32xf32>
    %86 = arith.mulf %84, %85 : vector<8x32xf32>
    %c0_76 = arith.constant 0 : index
    %c0_77 = arith.constant 0 : index
    %c0_78 = arith.constant 0 : index
    %c2_79 = arith.constant 2 : index
    %c0_80 = arith.constant 0 : index
    %87 = vector.load %arg4[%c0_76, %c0_77, %c0_78, %c2_79, %c0_80] : memref<1x8x1x4x32xf32, #tpu.memory_space<vmem>>, vector<1x8x1x1x32xf32>
    %88 = vector.shape_cast %87 : vector<1x8x1x1x32xf32> to vector<8x32xf32>
    %c0_81 = arith.constant 0 : index
    %c0_82 = arith.constant 0 : index
    %c0_83 = arith.constant 0 : index
    %c2_84 = arith.constant 2 : index
    %c0_85 = arith.constant 0 : index
    %89 = vector.load %arg5[%c0_81, %c0_82, %c0_83, %c2_84, %c0_85] : memref<1x8x1x4x32xf32, #tpu.memory_space<vmem>>, vector<1x8x1x1x32xf32>
    %90 = vector.shape_cast %89 : vector<1x8x1x1x32xf32> to vector<8x32xf32>
    %cst_86 = arith.constant dense<0.000000e+00> : vector<8x8xf32>
    %91 = tpu.matmul %86, %88, %cst_86 {dimension_numbers = #tpu.dot_dimension_numbers<[1], [1], [0], [0], [0, 0, 1, 0], [], []>} : vector<8x32xf32>, vector<8x32xf32>, vector<8x8xf32> -> vector<8x8xf32>
    %c2_87 = arith.constant 2 : index
    %c0_88 = arith.constant 0 : index
    %c0_89 = arith.constant 0 : index
    %92 = vector.load %arg7[%c2_87, %c0_88, %c0_89] : memref<4x8x1xf32, #tpu.memory_space<vmem>>, vector<1x8x1xf32>
    %93 = vector.shape_cast %92 : vector<1x8x1xf32> to vector<8x1xf32>
    %cst_90 = arith.constant dense<0xFF800000> : vector<8xf32>
    %94 = vector.multi_reduction <maximumf>, %91, %cst_90 [1] : vector<8x8xf32> to vector<8xf32>
    %95 = vector.shape_cast %94 : vector<8xf32> to vector<8x1xf32>
    %96 = arith.maximumf %93, %95 : vector<8x1xf32>
    %97 = arith.subf %93, %96 : vector<8x1xf32>
    %98 = math.exp %97 : vector<8x1xf32>
    %99 = vector.broadcast %96 : vector<8x1xf32> to vector<8x8xf32>
    %100 = arith.subf %91, %99 : vector<8x8xf32>
    %101 = math.exp %100 : vector<8x8xf32>
    %c2_91 = arith.constant 2 : index
    %c0_92 = arith.constant 0 : index
    %c0_93 = arith.constant 0 : index
    %102 = vector.load %arg8[%c2_91, %c0_92, %c0_93] : memref<4x8x1xf32, #tpu.memory_space<vmem>>, vector<1x8x1xf32>
    %103 = vector.shape_cast %102 : vector<1x8x1xf32> to vector<8x1xf32>
    %104 = arith.mulf %98, %103 : vector<8x1xf32>
    %cst_94 = arith.constant dense<0.000000e+00> : vector<8xf32>
    %105 = vector.multi_reduction <add>, %101, %cst_94 [1] : vector<8x8xf32> to vector<8xf32>
    %106 = vector.shape_cast %105 : vector<8xf32> to vector<8x1xf32>
    %107 = arith.addf %104, %106 : vector<8x1xf32>
    %c2_95 = arith.constant 2 : index
    %c0_96 = arith.constant 0 : index
    %c0_97 = arith.constant 0 : index
    %108 = vector.load %arg8[%c2_95, %c0_96, %c0_97] : memref<4x8x1xf32, #tpu.memory_space<vmem>>, vector<1x8x1xf32>
    %109 = vector.shape_cast %108 : vector<1x8x1xf32> to vector<8x1xf32>
    %110 = vector.shape_cast %107 : vector<8x1xf32> to vector<1x8x1xf32>
    tpu.vector_store %arg8[%c2_95, %c0_96, %c0_97], %110 {strides = array<i32>} : memref<4x8x1xf32, #tpu.memory_space<vmem>>, vector<1x8x1xf32>,
    %c2_98 = arith.constant 2 : index
    %c0_99 = arith.constant 0 : index
    %c0_100 = arith.constant 0 : index
    %111 = vector.load %arg9[%c2_98, %c0_99, %c0_100] : memref<4x8x32xf32, #tpu.memory_space<vmem>>, vector<1x8x32xf32>
    %112 = vector.shape_cast %111 : vector<1x8x32xf32> to vector<8x32xf32>
    %113 = vector.broadcast %98 : vector<8x1xf32> to vector<8x32xf32>
    %114 = arith.mulf %113, %112 : vector<8x32xf32>
    %cst_101 = arith.constant dense<0.000000e+00> : vector<8x32xf32>
    %115 = tpu.matmul %101, %90, %cst_101 {dimension_numbers = #tpu.dot_dimension_numbers<[1], [0], [0], [1], [0, 0, 1, 1], [], []>} : vector<8x8xf32>, vector<8x32xf32>, vector<8x32xf32> -> vector<8x32xf32>
    %116 = arith.addf %114, %115 : vector<8x32xf32>
    %c2_102 = arith.constant 2 : index
    %c0_103 = arith.constant 0 : index
    %c0_104 = arith.constant 0 : index
    %117 = vector.load %arg9[%c2_102, %c0_103, %c0_104] : memref<4x8x32xf32, #tpu.memory_space<vmem>>, vector<1x8x32xf32>
    %118 = vector.shape_cast %117 : vector<1x8x32xf32> to vector<8x32xf32>
    %119 = vector.shape_cast %116 : vector<8x32xf32> to vector<1x8x32xf32>
    tpu.vector_store %arg9[%c2_102, %c0_103, %c0_104], %119 {strides = array<i32>} : memref<4x8x32xf32, #tpu.memory_space<vmem>>, vector<1x8x32xf32>,
    %c2_105 = arith.constant 2 : index
    %c0_106 = arith.constant 0 : index
    %c0_107 = arith.constant 0 : index
    %120 = vector.load %arg7[%c2_105, %c0_106, %c0_107] : memref<4x8x1xf32, #tpu.memory_space<vmem>>, vector<1x8x1xf32>
    %121 = vector.shape_cast %120 : vector<1x8x1xf32> to vector<8x1xf32>
    %122 = vector.shape_cast %96 : vector<8x1xf32> to vector<1x8x1xf32>
    tpu.vector_store %arg7[%c2_105, %c0_106, %c0_107], %122 {strides = array<i32>} : memref<4x8x1xf32, #tpu.memory_space<vmem>>, vector<1x8x1xf32>,
    %c0_108 = arith.constant 0 : index
    %c0_109 = arith.constant 0 : index
    %c3 = arith.constant 3 : index
    %c0_110 = arith.constant 0 : index
    %123 = vector.load %arg3[%c0_108, %c0_109, %c3, %c0_110] : memref<1x8x4x32xf32, #tpu.memory_space<vmem>>, vector<1x8x1x32xf32>
    %124 = vector.shape_cast %123 : vector<1x8x1x32xf32> to vector<8x32xf32>
    %cst_111 = arith.constant 0.176776692 : f32
    %125 = vector.broadcast %cst_111 : f32 to vector<8x32xf32>
    %126 = arith.mulf %124, %125 : vector<8x32xf32>
    %c0_112 = arith.constant 0 : index
    %c0_113 = arith.constant 0 : index
    %c0_114 = arith.constant 0 : index
    %c3_115 = arith.constant 3 : index
    %c0_116 = arith.constant 0 : index
    %127 = vector.load %arg4[%c0_112, %c0_113, %c0_114, %c3_115, %c0_116] : memref<1x8x1x4x32xf32, #tpu.memory_space<vmem>>, vector<1x8x1x1x32xf32>
    %128 = vector.shape_cast %127 : vector<1x8x1x1x32xf32> to vector<8x32xf32>
    %c0_117 = arith.constant 0 : index
    %c0_118 = arith.constant 0 : index
    %c0_119 = arith.constant 0 : index
    %c3_120 = arith.constant 3 : index
    %c0_121 = arith.constant 0 : index
    %129 = vector.load %arg5[%c0_117, %c0_118, %c0_119, %c3_120, %c0_121] : memref<1x8x1x4x32xf32, #tpu.memory_space<vmem>>, vector<1x8x1x1x32xf32>
    %130 = vector.shape_cast %129 : vector<1x8x1x1x32xf32> to vector<8x32xf32>
    %cst_122 = arith.constant dense<0.000000e+00> : vector<8x8xf32>
    %131 = tpu.matmul %126, %128, %cst_122 {dimension_numbers = #tpu.dot_dimension_numbers<[1], [1], [0], [0], [0, 0, 1, 0], [], []>} : vector<8x32xf32>, vector<8x32xf32>, vector<8x8xf32> -> vector<8x8xf32>
    %c3_123 = arith.constant 3 : index
    %c0_124 = arith.constant 0 : index
    %c0_125 = arith.constant 0 : index
    %132 = vector.load %arg7[%c3_123, %c0_124, %c0_125] : memref<4x8x1xf32, #tpu.memory_space<vmem>>, vector<1x8x1xf32>
    %133 = vector.shape_cast %132 : vector<1x8x1xf32> to vector<8x1xf32>
    %cst_126 = arith.constant dense<0xFF800000> : vector<8xf32>
    %134 = vector.multi_reduction <maximumf>, %131, %cst_126 [1] : vector<8x8xf32> to vector<8xf32>
    %135 = vector.shape_cast %134 : vector<8xf32> to vector<8x1xf32>
    %136 = arith.maximumf %133, %135 : vector<8x1xf32>
    %137 = arith.subf %133, %136 : vector<8x1xf32>
    %138 = math.exp %137 : vector<8x1xf32>
    %139 = vector.broadcast %136 : vector<8x1xf32> to vector<8x8xf32>
    %140 = arith.subf %131, %139 : vector<8x8xf32>
    %141 = math.exp %140 : vector<8x8xf32>
    %c3_127 = arith.constant 3 : index
    %c0_128 = arith.constant 0 : index
    %c0_129 = arith.constant 0 : index
    %142 = vector.load %arg8[%c3_127, %c0_128, %c0_129] : memref<4x8x1xf32, #tpu.memory_space<vmem>>, vector<1x8x1xf32>
    %143 = vector.shape_cast %142 : vector<1x8x1xf32> to vector<8x1xf32>
    %144 = arith.mulf %138, %143 : vector<8x1xf32>
    %cst_130 = arith.constant dense<0.000000e+00> : vector<8xf32>
    %145 = vector.multi_reduction <add>, %141, %cst_130 [1] : vector<8x8xf32> to vector<8xf32>
    %146 = vector.shape_cast %145 : vector<8xf32> to vector<8x1xf32>
    %147 = arith.addf %144, %146 : vector<8x1xf32>
    %c3_131 = arith.constant 3 : index
    %c0_132 = arith.constant 0 : index
    %c0_133 = arith.constant 0 : index
    %148 = vector.load %arg8[%c3_131, %c0_132, %c0_133] : memref<4x8x1xf32, #tpu.memory_space<vmem>>, vector<1x8x1xf32>
    %149 = vector.shape_cast %148 : vector<1x8x1xf32> to vector<8x1xf32>
    %150 = vector.shape_cast %147 : vector<8x1xf32> to vector<1x8x1xf32>
    tpu.vector_store %arg8[%c3_131, %c0_132, %c0_133], %150 {strides = array<i32>} : memref<4x8x1xf32, #tpu.memory_space<vmem>>, vector<1x8x1xf32>,
    %c3_134 = arith.constant 3 : index
    %c0_135 = arith.constant 0 : index
    %c0_136 = arith.constant 0 : index
    %151 = vector.load %arg9[%c3_134, %c0_135, %c0_136] : memref<4x8x32xf32, #tpu.memory_space<vmem>>, vector<1x8x32xf32>
    %152 = vector.shape_cast %151 : vector<1x8x32xf32> to vector<8x32xf32>
    %153 = vector.broadcast %138 : vector<8x1xf32> to vector<8x32xf32>
    %154 = arith.mulf %153, %152 : vector<8x32xf32>
    %cst_137 = arith.constant dense<0.000000e+00> : vector<8x32xf32>
    %155 = tpu.matmul %141, %130, %cst_137 {dimension_numbers = #tpu.dot_dimension_numbers<[1], [0], [0], [1], [0, 0, 1, 1], [], []>} : vector<8x8xf32>, vector<8x32xf32>, vector<8x32xf32> -> vector<8x32xf32>
    %156 = arith.addf %154, %155 : vector<8x32xf32>
    %c3_138 = arith.constant 3 : index
    %c0_139 = arith.constant 0 : index
    %c0_140 = arith.constant 0 : index
    %157 = vector.load %arg9[%c3_138, %c0_139, %c0_140] : memref<4x8x32xf32, #tpu.memory_space<vmem>>, vector<1x8x32xf32>
    %158 = vector.shape_cast %157 : vector<1x8x32xf32> to vector<8x32xf32>
    %159 = vector.shape_cast %156 : vector<8x32xf32> to vector<1x8x32xf32>
    tpu.vector_store %arg9[%c3_138, %c0_139, %c0_140], %159 {strides = array<i32>} : memref<4x8x32xf32, #tpu.memory_space<vmem>>, vector<1x8x32xf32>,
    %c3_141 = arith.constant 3 : index
    %c0_142 = arith.constant 0 : index
    %c0_143 = arith.constant 0 : index
    %160 = vector.load %arg7[%c3_141, %c0_142, %c0_143] : memref<4x8x1xf32, #tpu.memory_space<vmem>>, vector<1x8x1xf32>
    %161 = vector.shape_cast %160 : vector<1x8x1xf32> to vector<8x1xf32>
    %162 = vector.shape_cast %136 : vector<8x1xf32> to vector<1x8x1xf32>
    tpu.vector_store %arg7[%c3_141, %c0_142, %c0_143], %162 {strides = array<i32>} : memref<4x8x1xf32, #tpu.memory_space<vmem>>, vector<1x8x1xf32>,
    %c0_i32_144 = arith.constant 0 : i32
    %163 = arith.cmpi eq, %arg2, %c0_i32_144 : i32
    %164 = arith.extui %163 : i1 to i32
    %c0_i32_145 = arith.constant 0 : i32
    %165 = arith.cmpi ne, %164, %c0_i32_145 : i32
    scf.if %165 {
      %c0_146 = arith.constant 0 : index
      %c0_147 = arith.constant 0 : index
      %c0_148 = arith.constant 0 : index
      %166 = vector.load %arg8[%c0_146, %c0_147, %c0_148] : memref<4x8x1xf32, #tpu.memory_space<vmem>>, vector<1x8x1xf32>
      %167 = vector.shape_cast %166 : vector<1x8x1xf32> to vector<8x1xf32>
      %168 = tpu.reciprocal %167 : vector<8x1xf32> -> vector<8x1xf32>
      %c0_149 = arith.constant 0 : index
      %c0_150 = arith.constant 0 : index
      %c0_151 = arith.constant 0 : index
      %169 = vector.load %arg9[%c0_149, %c0_150, %c0_151] : memref<4x8x32xf32, #tpu.memory_space<vmem>>, vector<1x8x32xf32>
      %170 = vector.shape_cast %169 : vector<1x8x32xf32> to vector<8x32xf32>
      %171 = vector.broadcast %168 : vector<8x1xf32> to vector<8x32xf32>
      %172 = arith.mulf %170, %171 : vector<8x32xf32>
      %c0_152 = arith.constant 0 : index
      %c0_153 = arith.constant 0 : index
      %c0_154 = arith.constant 0 : index
      %c0_155 = arith.constant 0 : index
      %173 = vector.load %arg6[%c0_152, %c0_153, %c0_154, %c0_155] : memref<1x8x4x32xf32, #tpu.memory_space<vmem>>, vector<1x8x1x32xf32>
      %174 = vector.shape_cast %173 : vector<1x8x1x32xf32> to vector<8x32xf32>
      %175 = vector.shape_cast %172 : vector<8x32xf32> to vector<1x8x1x32xf32>
      tpu.vector_store %arg6[%c0_152, %c0_153, %c0_154, %c0_155], %175 {strides = array<i32>} : memref<1x8x4x32xf32, #tpu.memory_space<vmem>>, vector<1x8x1x32xf32>,
      %c1_156 = arith.constant 1 : index
      %c0_157 = arith.constant 0 : index
      %c0_158 = arith.constant 0 : index
      %176 = vector.load %arg8[%c1_156, %c0_157, %c0_158] : memref<4x8x1xf32, #tpu.memory_space<vmem>>, vector<1x8x1xf32>
      %177 = vector.shape_cast %176 : vector<1x8x1xf32> to vector<8x1xf32>
      %178 = tpu.reciprocal %177 : vector<8x1xf32> -> vector<8x1xf32>
      %c1_159 = arith.constant 1 : index
      %c0_160 = arith.constant 0 : index
      %c0_161 = arith.constant 0 : index
      %179 = vector.load %arg9[%c1_159, %c0_160, %c0_161] : memref<4x8x32xf32, #tpu.memory_space<vmem>>, vector<1x8x32xf32>
      %180 = vector.shape_cast %179 : vector<1x8x32xf32> to vector<8x32xf32>
      %181 = vector.broadcast %178 : vector<8x1xf32> to vector<8x32xf32>
      %182 = arith.mulf %180, %181 : vector<8x32xf32>
      %c0_162 = arith.constant 0 : index
      %c0_163 = arith.constant 0 : index
      %c1_164 = arith.constant 1 : index
      %c0_165 = arith.constant 0 : index
      %183 = vector.load %arg6[%c0_162, %c0_163, %c1_164, %c0_165] : memref<1x8x4x32xf32, #tpu.memory_space<vmem>>, vector<1x8x1x32xf32>
      %184 = vector.shape_cast %183 : vector<1x8x1x32xf32> to vector<8x32xf32>
      %185 = vector.shape_cast %182 : vector<8x32xf32> to vector<1x8x1x32xf32>
      tpu.vector_store %arg6[%c0_162, %c0_163, %c1_164, %c0_165], %185 {strides = array<i32>} : memref<1x8x4x32xf32, #tpu.memory_space<vmem>>, vector<1x8x1x32xf32>,
      %c2_166 = arith.constant 2 : index
      %c0_167 = arith.constant 0 : index
      %c0_168 = arith.constant 0 : index
      %186 = vector.load %arg8[%c2_166, %c0_167, %c0_168] : memref<4x8x1xf32, #tpu.memory_space<vmem>>, vector<1x8x1xf32>
      %187 = vector.shape_cast %186 : vector<1x8x1xf32> to vector<8x1xf32>
      %188 = tpu.reciprocal %187 : vector<8x1xf32> -> vector<8x1xf32>
      %c2_169 = arith.constant 2 : index
      %c0_170 = arith.constant 0 : index
      %c0_171 = arith.constant 0 : index
      %189 = vector.load %arg9[%c2_169, %c0_170, %c0_171] : memref<4x8x32xf32, #tpu.memory_space<vmem>>, vector<1x8x32xf32>
      %190 = vector.shape_cast %189 : vector<1x8x32xf32> to vector<8x32xf32>
      %191 = vector.broadcast %188 : vector<8x1xf32> to vector<8x32xf32>
      %192 = arith.mulf %190, %191 : vector<8x32xf32>
      %c0_172 = arith.constant 0 : index
      %c0_173 = arith.constant 0 : index
      %c2_174 = arith.constant 2 : index
      %c0_175 = arith.constant 0 : index
      %193 = vector.load %arg6[%c0_172, %c0_173, %c2_174, %c0_175] : memref<1x8x4x32xf32, #tpu.memory_space<vmem>>, vector<1x8x1x32xf32>
      %194 = vector.shape_cast %193 : vector<1x8x1x32xf32> to vector<8x32xf32>
      %195 = vector.shape_cast %192 : vector<8x32xf32> to vector<1x8x1x32xf32>
      tpu.vector_store %arg6[%c0_172, %c0_173, %c2_174, %c0_175], %195 {strides = array<i32>} : memref<1x8x4x32xf32, #tpu.memory_space<vmem>>, vector<1x8x1x32xf32>,
      %c3_176 = arith.constant 3 : index
      %c0_177 = arith.constant 0 : index
      %c0_178 = arith.constant 0 : index
      %196 = vector.load %arg8[%c3_176, %c0_177, %c0_178] : memref<4x8x1xf32, #tpu.memory_space<vmem>>, vector<1x8x1xf32>
      %197 = vector.shape_cast %196 : vector<1x8x1xf32> to vector<8x1xf32>
      %198 = tpu.reciprocal %197 : vector<8x1xf32> -> vector<8x1xf32>
      %c3_179 = arith.constant 3 : index
      %c0_180 = arith.constant 0 : index
      %c0_181 = arith.constant 0 : index
      %199 = vector.load %arg9[%c3_179, %c0_180, %c0_181] : memref<4x8x32xf32, #tpu.memory_space<vmem>>, vector<1x8x32xf32>
      %200 = vector.shape_cast %199 : vector<1x8x32xf32> to vector<8x32xf32>
      %201 = vector.broadcast %198 : vector<8x1xf32> to vector<8x32xf32>
      %202 = arith.mulf %200, %201 : vector<8x32xf32>
      %c0_182 = arith.constant 0 : index
      %c0_183 = arith.constant 0 : index
      %c3_184 = arith.constant 3 : index
      %c0_185 = arith.constant 0 : index
      %203 = vector.load %arg6[%c0_182, %c0_183, %c3_184, %c0_185] : memref<1x8x4x32xf32, #tpu.memory_space<vmem>>, vector<1x8x1x32xf32>
      %204 = vector.shape_cast %203 : vector<1x8x1x32xf32> to vector<8x32xf32>
      %205 = vector.shape_cast %202 : vector<8x32xf32> to vector<1x8x1x32xf32>
      tpu.vector_store %arg6[%c0_182, %c0_183, %c3_184, %c0_185], %205 {strides = array<i32>} : memref<1x8x4x32xf32, #tpu.memory_space<vmem>>, vector<1x8x1x32xf32>,
    } else {
    }
    return
  }
  func.func @transform_0(%arg0: i32, %arg1: i32, %arg2: i32) -> (i32, i32, i32, i32) {
    %c0_i32 = arith.constant 0 : i32
    %c0_i32_0 = arith.constant 0 : i32
    %c0_i32_1 = arith.constant 0 : i32
    return %arg0, %arg1, %c0_i32, %c0_i32_0 : i32, i32, i32, i32
  }
  func.func @transform_1(%arg0: i32, %arg1: i32, %arg2: i32) -> (i32, i32, i32, i32, i32) {
    %c0_i32 = arith.constant 0 : i32
    %c0_i32_0 = arith.constant 0 : i32
    %c0_i32_1 = arith.constant 0 : i32
    %c0_i32_2 = arith.constant 0 : i32
    return %arg0, %arg2, %c0_i32, %c0_i32_0, %c0_i32_1 : i32, i32, i32, i32, i32
  }
  func.func @transform_2(%arg0: i32, %arg1: i32, %arg2: i32) -> (i32, i32, i32, i32, i32) {
    %c1_i32 = arith.constant 1 : i32
    %c0_i32 = arith.constant 0 : i32
    %c0_i32_0 = arith.constant 0 : i32
    %c0_i32_1 = arith.constant 0 : i32
    return %arg0, %arg2, %c1_i32, %c0_i32, %c0_i32_0 : i32, i32, i32, i32, i32
  }
  func.func @transform_3(%arg0: i32, %arg1: i32, %arg2: i32) -> (i32, i32, i32, i32) {
    %c0_i32 = arith.constant 0 : i32
    %c0_i32_0 = arith.constant 0 : i32
    %c0_i32_1 = arith.constant 0 : i32
    return %arg0, %arg1, %c0_i32, %c0_i32_0 : i32, i32, i32, i32
  }
}

</mosaic_0001>

<llo_original>
// kernel: tpu_custom_call.1
$region0: #{tpu_custom_call.1}
  #allocation0 [shape = 'u32[]', space=smem, size = 0x4, offset = 0x4, fixed_abs, tag = 'smem constant byte address 0x4 - core index']
  #allocation1 [shape = 'u32[144,128]{1,0:T(1,128)}', space=vmem, size = 0x12000, scoped, tag = 'internal scratch']
  #allocation2 [shape = 'f32[4,8,1]{2,1,0:T(8,128)}', space=vmem, size = 0x4000, scoped, tag = 'scratch operand']
  #allocation3 [shape = 'f32[4,8,1]{2,1,0:T(8,128)}', space=vmem, size = 0x4000, scoped, tag = 'scratch operand']
  #allocation4 [shape = 'f32[4,8,32]{2,1,0:T(8,128)}', space=vmem, size = 0x4000, scoped, tag = 'scratch operand']
  %s0 = inlined_call_operand.hbm [shape: f32[2,8,4,32], index: 0, kind: input, shape index: {}]
  %s1 = inlined_call_operand.hbm [shape: f32[2,8,2,4,32], index: 1, kind: input, shape index: {}]
  %s2 = inlined_call_operand.hbm [shape: f32[2,8,2,4,32], index: 2, kind: input, shape index: {}]
  %s3 = inlined_call_operand.hbm [shape: f32[2,8,4,32], index: 3, kind: output, shape index: {}]
  %s4 = sld [smem:[#allocation0]]
  $region65: #{tpu_custom_call.1} parent=0
    _
  %s6 = ssub.s32 1, %s4
  %s7 = scalar_select 0, %s6, %s4
  $region1: #{tpu_custom_call.1} parent=0
    #allocation5 [shape = 'u8[32768]{0}', space=vmem, size = 0x8000, scoped, tag = 'input window, operand 0']
    #allocation6 [shape = 's32[2]{0}', space=sflag, size = 0x8, scoped, tag = 'scoped memory for tpu_custom_call.1']
    #allocation7 [shape = 's32[2]{0}', space=sflag, size = 0x8, scoped, tag = 'scoped memory for tpu_custom_call.1']
    #allocation8 [shape = 'u8[32768]{0}', space=vmem, size = 0x8000, scoped, tag = 'input window, operand 1']
    #allocation9 [shape = 's32[2]{0}', space=sflag, size = 0x8, scoped, tag = 'scoped memory for tpu_custom_call.1']
    #allocation10 [shape = 'u8[32768]{0}', space=vmem, size = 0x8000, scoped, tag = 'input window, operand 2']
    #allocation11 [shape = 'u8[32768]{0}', space=vmem, size = 0x8000, scoped, tag = 'output window, operand 0']
    %8 = vsyncpa [#allocation6], 0
    %s9 = scalar_lea.sflag [#allocation6], 1
    %10 = vsyncpa %s9, 0
    %11 = vsyncpa [#allocation9], 0
    %s12 = scalar_lea.sflag [#allocation9], 1
    %13 = vsyncpa %s12, 0
    %14 = vsyncpa [#allocation7], 0
    %s15 = scalar_lea.sflag [#allocation7], 1
    %16 = vsyncpa %s15, 0
    loop: start=0, step=1, limit=4
    $region2: #{tpu_custom_call.1} parent=1 // loop_pre_header
      _
    $region3: #{tpu_custom_call.1} parent=1 // loop_header
      %s18 = sphi 0, %s22
      %p19 = scmp.ge.s32.totalorder %s18, 4
      %s25 = sphi 0, %s44
      %s26 = sphi 0, %s40
      %s27 = sphi 0, %s36
      %s28 = sphi 0, %s25
      %s29 = sphi 0, %s26
      %s30 = sphi 0, %s27
      %s31 = sphi 0, %s28
      %s32 = sphi 0, %s29
      %s33 = sphi 0, %s30
      %s49 = sphi 0, %s51
      %s52 = sphi 0, %s49
      %s53 = sphi 0, %s52
      %s69 = sphi 0, %s53
      %s77 = sphi 0, %s79
      %s80 = sphi 0, %s77
      %s81 = sphi 0, %s80
      %s97 = sphi 0, %s81
      %s105 = sphi 0, %s107
      %s108 = sphi 0, %s105
      %s109 = sphi 0, %s108
      %s125 = sphi 0, %s109
      %s133 = sphi 0, %s135
      %s136 = sphi 0, %s133
      %s137 = sphi 0, %s136
      %s153 = sphi 0, %s137
    $region4: #{tpu_custom_call.1} parent=1 // loop_header_branch
      %21 = sbr.rel (%p19) target = $region8
    $region5: #{tpu_custom_call.1} parent=1 // loop_body
      %s23 = ssub.s32 %s18, 1
      %s24 = ssub.s32 %s18, 2
      %s34 = sadd.s32 1, %s27
      %p35 = scmp.ge.s32.totalorder %s34, 1
      %s36 = scalar_select %p35, 0, %s34
      %s37 = sadd.s32 1, %s26
      %s38 = scalar_select %p35, %s37, %s26
      %p39 = scmp.ge.s32.totalorder %s38, 1
      %s40 = scalar_select %p39, 0, %s38
      %s41 = sadd.s32 1, %s25
      %s42 = scalar_select %p39, %s41, %s25
      %p43 = scmp.ge.s32.totalorder %s42, 2
      %s44 = scalar_select %p43, 0, %s42
      %s45 = ssub.s32 %s25, %s44
      %s46 = ssub.s32 %s26, %s40
      %s47 = sor.u32 %s45, %s46
      %p48 = scmp.eq.s32.totalorder %s47, 0
      %s50 = sadd.s32 %s49, 1
      %s51 = scalar_select %p48, %s49, %s50
      %p54 = pneg %p48
      %p55 = scmp.eq.s32.totalorder %s18, 1
      %p56 = por %p54, %p55
      %p57 = scmp.ne.s32.totalorder %s49, %s52
      %p58 = scmp.eq.s32.totalorder %s18, 0
      %p59 = por %p57, %p58
      %p60 = scmp.ne.s32.totalorder %s49, %s52
      %p61 = scmp.eq.s32.totalorder %s23, 1
      %p62 = por %p60, %p61
      %p63 = scmp.ne.s32.totalorder %s52, %s53
      %p64 = scmp.eq.s32.totalorder %s23, 0
      %p65 = por %p63, %p64
      %p66 = scmp.ne.s32.totalorder %s52, %s53
      %p67 = scmp.eq.s32.totalorder %s24, 1
      %p68 = por %p66, %p67
      %p70 = scmp.ne.s32.totalorder %s53, %s69
      %p71 = scmp.eq.s32.totalorder %s24, 0
      %p72 = por %p70, %p71
      %s73 = ssub.s32 %s25, %s44
      %s74 = ssub.s32 %s27, %s36
      %s75 = sor.u32 %s73, %s74
      %p76 = scmp.eq.s32.totalorder %s75, 0
      %s78 = sadd.s32 %s77, 1
      %s79 = scalar_select %p76, %s77, %s78
      %p82 = pneg %p76
      %p83 = scmp.eq.s32.totalorder %s18, 1
      %p84 = por %p82, %p83
      %p85 = scmp.ne.s32.totalorder %s77, %s80
      %p86 = scmp.eq.s32.totalorder %s18, 0
      %p87 = por %p85, %p86
      %p88 = scmp.ne.s32.totalorder %s77, %s80
      %p89 = scmp.eq.s32.totalorder %s23, 1
      %p90 = por %p88, %p89
      %p91 = scmp.ne.s32.totalorder %s80, %s81
      %p92 = scmp.eq.s32.totalorder %s23, 0
      %p93 = por %p91, %p92
      %p94 = scmp.ne.s32.totalorder %s80, %s81
      %p95 = scmp.eq.s32.totalorder %s24, 1
      %p96 = por %p94, %p95
      %p98 = scmp.ne.s32.totalorder %s81, %s97
      %p99 = scmp.eq.s32.totalorder %s24, 0
      %p100 = por %p98, %p99
      %s101 = ssub.s32 %s25, %s44
      %s102 = ssub.s32 %s27, %s36
      %s103 = sor.u32 %s101, %s102
      %p104 = scmp.eq.s32.totalorder %s103, 0
      %s106 = sadd.s32 %s105, 1
      %s107 = scalar_select %p104, %s105, %s106
      %p110 = pneg %p104
      %p111 = scmp.eq.s32.totalorder %s18, 1
      %p112 = por %p110, %p111
      %p113 = scmp.ne.s32.totalorder %s105, %s108
      %p114 = scmp.eq.s32.totalorder %s18, 0
      %p115 = por %p113, %p114
      %p116 = scmp.ne.s32.totalorder %s105, %s108
      %p117 = scmp.eq.s32.totalorder %s23, 1
      %p118 = por %p116, %p117
      %p119 = scmp.ne.s32.totalorder %s108, %s109
      %p120 = scmp.eq.s32.totalorder %s23, 0
      %p121 = por %p119, %p120
      %p122 = scmp.ne.s32.totalorder %s108, %s109
      %p123 = scmp.eq.s32.totalorder %s24, 1
      %p124 = por %p122, %p123
      %p126 = scmp.ne.s32.totalorder %s109, %s125
      %p127 = scmp.eq.s32.totalorder %s24, 0
      %p128 = por %p126, %p127
      %s129 = ssub.s32 %s25, %s44
      %s130 = ssub.s32 %s26, %s40
      %s131 = sor.u32 %s129, %s130
      %p132 = scmp.eq.s32.totalorder %s131, 0
      %s134 = sadd.s32 %s133, 1
      %s135 = scalar_select %p132, %s133, %s134
      %p138 = pneg %p132
      %p139 = scmp.eq.s32.totalorder %s18, 1
      %p140 = por %p138, %p139
      %p141 = scmp.ne.s32.totalorder %s133, %s136
      %p142 = scmp.eq.s32.totalorder %s18, 0
      %p143 = por %p141, %p142
      %p144 = scmp.ne.s32.totalorder %s133, %s136
      %p145 = scmp.eq.s32.totalorder %s23, 1
      %p146 = por %p144, %p145
      %p147 = scmp.ne.s32.totalorder %s136, %s137
      %p148 = scmp.eq.s32.totalorder %s23, 0
      %p149 = por %p147, %p148
      %p150 = scmp.ne.s32.totalorder %s136, %s137
      %p151 = scmp.eq.s32.totalorder %s24, 1
      %p152 = por %p150, %p151
      %p154 = scmp.ne.s32.totalorder %s137, %s153
      %p155 = scmp.eq.s32.totalorder %s24, 0
      %p156 = por %p154, %p155
      %p157 = scmp.le.s32.totalorder 1, %s18
      %p158 = scmp.lt.s32.totalorder %s18, 3
      %p159 = pnand %p157, %p158
      %p160 = pneg %p159
      // Predicated region
      $region9: #{tpu_custom_call.1} parent=5 // pred_check
        _
      $region10: #{tpu_custom_call.1} parent=5 // pred_check_branch
        %162 = sbr.rel (%p159) target = $region12
      $region11: #{tpu_custom_call.1} parent=5 // pred_region
        %s163 = ssub.s32 %s18, 1
      $region12: #{tpu_custom_call.1} parent=5 // pred_fallthru
        _
      %p164 = scmp.lt.s32.totalorder %s18, 2
      // Predicated region
      $region13: #{tpu_custom_call.1} parent=5 // pred_check
        %p165 = pneg %p164
      $region14: #{tpu_custom_call.1} parent=5 // pred_check_branch
        %167 = sbr.rel (%p165) target = $region16
      $region15: #{tpu_custom_call.1} parent=5 // pred_region
        // Predicated region
        $region17: #{tpu_custom_call.1} parent=15 // pred_check
          %p168 = pneg %p59
        $region18: #{tpu_custom_call.1} parent=15 // pred_check_branch
          %170 = sbr.rel (%p168) target = $region20
        $region19: #{tpu_custom_call.1} parent=15 // pred_region
          %s171 = sand.u32 %s49, 1
          %s172 = scalar_lea.sflag [#allocation6], %s171
          %s173 = sand.u32 %s49, 1
          %s174 = smul.addr %s173, 32
          %s175 = scalar_lea.vmem [#allocation5], %s174
          %s176 = smul.u32 8, %s26
          %s178 = ssub.s32 512, 512
          %179 = vsyncadd %s172, %s178
          %s180 = smul.addr %s25, 8
          %s181 = sadd.s32 %s176, %s180
          %s182 = smul.addr %s181, 64
          %s183 = scalar_lea.hbm %s0, %s182
          %s184 = sshll.u32 %s175, 4
          %s185 = int_to_ptr.vmem [resolvable:$true] %s184
          %190 = dma.hbm_to_vmem [thread:$0]  %s183, 512, %s185, %s172, 64, 64, 4
        $region20: #{tpu_custom_call.1} parent=15 // pred_fallthru
          _
        // Predicated region
        $region21: #{tpu_custom_call.1} parent=15 // pred_check
          %p191 = pneg %p87
        $region22: #{tpu_custom_call.1} parent=15 // pred_check_branch
          %193 = sbr.rel (%p191) target = $region24
        $region23: #{tpu_custom_call.1} parent=15 // pred_region
          %s194 = sand.u32 %s18, 1
          %s195 = scalar_lea.sflag [#allocation9], %s194
          %s196 = sand.u32 %s77, 1
          %s197 = smul.addr %s196, 32
          %s198 = scalar_lea.vmem [#allocation8], %s197
          %s199 = smul.u32 8, %s27
          %s201 = ssub.s32 512, 512
          %202 = vsyncadd %s195, %s201
          %s203 = smul.addr %s199, 2
          %s204 = smul.addr %s25, 16
          %s205 = sadd.s32 %s203, %s204
          %s206 = smul.addr %s205, 64
          %s207 = scalar_lea.hbm %s1, %s206
          %s208 = sshll.u32 %s198, 4
          %s209 = int_to_ptr.vmem [resolvable:$true] %s208
          %214 = dma.hbm_to_vmem [thread:$0]  %s207, 512, %s209, %s195, 128, 64, 4
        $region24: #{tpu_custom_call.1} parent=15 // pred_fallthru
          _
        // Predicated region
        $region25: #{tpu_custom_call.1} parent=15 // pred_check
          %p215 = pneg %p115
        $region26: #{tpu_custom_call.1} parent=15 // pred_check_branch
          %217 = sbr.rel (%p215) target = $region28
        $region27: #{tpu_custom_call.1} parent=15 // pred_region
          %s218 = sand.u32 %s18, 1
          %s219 = scalar_lea.sflag [#allocation9], %s218
          %s220 = sand.u32 %s105, 1
          %s221 = smul.addr %s220, 32
          %s222 = scalar_lea.vmem [#allocation10], %s221
          %s223 = smul.u32 8, %s27
          %s225 = ssub.s32 512, 512
          %226 = vsyncadd %s219, %s225
          %s227 = smul.addr %s223, 2
          %s228 = sadd.s32 1, %s227
          %s229 = smul.addr %s25, 16
          %s230 = sadd.s32 %s228, %s229
          %s231 = smul.addr %s230, 64
          %s232 = scalar_lea.hbm %s2, %s231
          %s233 = sshll.u32 %s222, 4
          %s234 = int_to_ptr.vmem [resolvable:$true] %s233
          %239 = dma.hbm_to_vmem [thread:$0]  %s232, 512, %s234, %s219, 128, 64, 4
        $region28: #{tpu_custom_call.1} parent=15 // pred_fallthru
          _
      $region16: #{tpu_custom_call.1} parent=5 // pred_fallthru
        _
      %p240 = scmp.le.s32.totalorder 1, %s18
      %p241 = scmp.lt.s32.totalorder %s18, 3
      %p242 = pnand %p240, %p241
      %p243 = pneg %p242
      // Predicated region
      $region29: #{tpu_custom_call.1} parent=5 // pred_check
        _
      $region30: #{tpu_custom_call.1} parent=5 // pred_check_branch
        %245 = sbr.rel (%p242) target = $region32
      $region31: #{tpu_custom_call.1} parent=5 // pred_region
        %s246 = ssub.s32 %s18, 1
        %s247 = sand.u32 %s52, 1
        %s248 = scalar_lea.sflag [#allocation6], %s247
        %s249 = sand.u32 %s52, 1
        %s250 = smul.addr %s249, 32
        %s251 = scalar_lea.vmem [#allocation5], %s250
        // Predicated region
        $region33: #{tpu_custom_call.1} parent=31 // pred_check
          %p252 = pneg %p65
        $region34: #{tpu_custom_call.1} parent=31 // pred_check_branch
          %254 = sbr.rel (%p252) target = $region36
        $region35: #{tpu_custom_call.1} parent=31 // pred_region
          %255 = dma.done %s248, 512
        $region36: #{tpu_custom_call.1} parent=31 // pred_fallthru
          _
        %s256 = sand.u32 %s23, 1
        %s257 = scalar_lea.sflag [#allocation9], %s256
        %s258 = sand.u32 %s80, 1
        %s259 = smul.addr %s258, 32
        %s260 = scalar_lea.vmem [#allocation8], %s259
        // Predicated region
        $region37: #{tpu_custom_call.1} parent=31 // pred_check
          %p261 = pneg %p93
        $region38: #{tpu_custom_call.1} parent=31 // pred_check_branch
          %263 = sbr.rel (%p261) target = $region40
        $region39: #{tpu_custom_call.1} parent=31 // pred_region
          %264 = dma.done %s257, 512
        $region40: #{tpu_custom_call.1} parent=31 // pred_fallthru
          _
        %s265 = sand.u32 %s23, 1
        %s266 = scalar_lea.sflag [#allocation9], %s265
        %s267 = sand.u32 %s108, 1
        %s268 = smul.addr %s267, 32
        %s269 = scalar_lea.vmem [#allocation10], %s268
        // Predicated region
        $region41: #{tpu_custom_call.1} parent=31 // pred_check
          %p270 = pneg %p121
        $region42: #{tpu_custom_call.1} parent=31 // pred_check_branch
          %272 = sbr.rel (%p270) target = $region44
        $region43: #{tpu_custom_call.1} parent=31 // pred_region
          %273 = dma.done %s266, 512
        $region44: #{tpu_custom_call.1} parent=31 // pred_fallthru
          _
        %s274 = sand.u32 %s52, 1
        %s275 = scalar_lea.sflag [#allocation6], %s274
        %s276 = sand.u32 %s52, 1
        %s277 = smul.addr %s276, 32
        %s278 = scalar_lea.vmem [#allocation5], %s277
        %p279 = pneg %p65
        %p280 = pneg %p62
        %s281 = sand.u32 %s23, 1
        %s282 = scalar_lea.sflag [#allocation9], %s281
        %s283 = sand.u32 %s80, 1
        %s284 = smul.addr %s283, 32
        %s285 = scalar_lea.vmem [#allocation8], %s284
        %p286 = pneg %p93
        %p287 = pneg %p90
        %s288 = sand.u32 %s23, 1
        %s289 = scalar_lea.sflag [#allocation9], %s288
        %s290 = sand.u32 %s108, 1
        %s291 = smul.addr %s290, 32
        %s292 = scalar_lea.vmem [#allocation10], %s291
        %p293 = pneg %p121
        %p294 = pneg %p118
        %p295 = pneg %p149
        %p296 = pneg %p146
        %s297 = sand.u32 %s136, 1
        %s298 = scalar_lea.sflag [#allocation7], %s297
        %s299 = sand.u32 %s136, 1
        %s300 = smul.addr %s299, 32
        %s301 = scalar_lea.vmem [#allocation11], %s300
        %s302 = smul.u32 8, %s29
        %s303 = smul.u32 8, %s30
        %s304 = smul.u32 8, %s30
        %s305 = smul.u32 8, %s29
        %p306 = scmp.eq.s32.totalorder %s30, 0
        // Predicated region
        $region45: #{tpu_custom_call.1} parent=31 // pred_check
          %p307 = pneg %p306
        $region46: #{tpu_custom_call.1} parent=31 // pred_check_branch
          %309 = sbr.rel (%p307) target = $region48
        $region47: #{tpu_custom_call.1} parent=31 // pred_region
          %vm310 = vcmask 7168
          %311 = vst.msk [vmem:[#allocation2] sm:$0xff] %vm310, -inf
          %312 = vst.msk [vmem:[#allocation2 + $0x8] sm:$0xff] %vm310, -inf
          %313 = vst.msk [vmem:[#allocation2 + $0x10] sm:$0xff] %vm310, -inf
          %314 = vst.msk [vmem:[#allocation2 + $0x18] sm:$0xff] %vm310, -inf
          %315 = vst.msk [vmem:[#allocation3] sm:$0xff] %vm310, 0.0
          %316 = vst.msk [vmem:[#allocation3 + $0x8] sm:$0xff] %vm310, 0.0
          %317 = vst.msk [vmem:[#allocation3 + $0x10] sm:$0xff] %vm310, 0.0
          %318 = vst.msk [vmem:[#allocation3 + $0x18] sm:$0xff] %vm310, 0.0
          %vm319 = vcmask 261120
          %320 = vst.msk [vmem:[#allocation4] sm:$0xff] %vm319, 0.0
          %321 = vst.msk [vmem:[#allocation4 + $0x8] sm:$0xff] %vm319, 0.0
          %322 = vst.msk [vmem:[#allocation4 + $0x10] sm:$0xff] %vm319, 0.0
          %323 = vst.msk [vmem:[#allocation4 + $0x18] sm:$0xff] %vm319, 0.0
        $region48: #{tpu_custom_call.1} parent=31 // pred_fallthru
          _
        %v324 = vld [vmem:[%s251] sm:$0x1]
        %v325 = vld [vmem:[%s251 + $0x4] sm:$0x1]
        %v326 = vld [vmem:[%s251 + $0x8] sm:$0x1]
        %v327 = vld [vmem:[%s251 + $0xc] sm:$0x1]
        %v328 = vld [vmem:[%s251 + $0x10] sm:$0x1]
        %v329 = vld [vmem:[%s251 + $0x14] sm:$0x1]
        %v330 = vld [vmem:[%s251 + $0x18] sm:$0x1]
        %v331 = vld [vmem:[%s251 + $0x1c] sm:$0x1]
        %v332 = vmul.f32 %v324, 0.17677669
        %v333 = vmul.f32 %v325, 0.17677669
        %v334 = vmul.f32 %v326, 0.17677669
        %v335 = vmul.f32 %v327, 0.17677669
        %v336 = vmul.f32 %v328, 0.17677669
        %v337 = vmul.f32 %v329, 0.17677669
        %v338 = vmul.f32 %v330, 0.17677669
        %v339 = vmul.f32 %v331, 0.17677669
        %v340 = vld [vmem:[%s260] sm:$0x1]
        %v341 = vld [vmem:[%s260 + $0x4] sm:$0x1]
        %v342 = vld [vmem:[%s260 + $0x8] sm:$0x1]
        %v343 = vld [vmem:[%s260 + $0xc] sm:$0x1]
        %v344 = vld [vmem:[%s260 + $0x10] sm:$0x1]
        %v345 = vld [vmem:[%s260 + $0x14] sm:$0x1]
        %v346 = vld [vmem:[%s260 + $0x18] sm:$0x1]
        %v347 = vld [vmem:[%s260 + $0x1c] sm:$0x1]
        %v348 = vld [vmem:[%s269] sm:$0x1]
        %v349 = vld [vmem:[%s269 + $0x4] sm:$0x1]
        %v350 = vld [vmem:[%s269 + $0x8] sm:$0x1]
        %v351 = vld [vmem:[%s269 + $0xc] sm:$0x1]
        %v352 = vld [vmem:[%s269 + $0x10] sm:$0x1]
        %v353 = vld [vmem:[%s269 + $0x14] sm:$0x1]
        %v354 = vld [vmem:[%s269 + $0x18] sm:$0x1]
        %v355 = vld [vmem:[%s269 + $0x1c] sm:$0x1]
        %v364 = vrot.slane %v333, 7
        %vm365 = vcmask 1041409
        %v366 = vsel %vm365, %v364, %v332
        %v367 = vrot.slane %v334, 6
        %vm368 = vcmask 1042434
        %v369 = vsel %vm368, %v367, %v366
        %v370 = vrot.slane %v335, 5
        %vm371 = vcmask 1043459
        %v372 = vsel %vm371, %v370, %v369
        %v373 = vrot.slane %v336, 4
        %vm374 = vcmask 1044484
        %v375 = vsel %vm374, %v373, %v372
        %v376 = vrot.slane %v337, 3
        %vm377 = vcmask 1045509
        %v378 = vsel %vm377, %v376, %v375
        %v379 = vrot.slane %v338, 2
        %vm380 = vcmask 1046534
        %v381 = vsel %vm380, %v379, %v378
        %v382 = vrot.slane %v339, 1
        %vm383 = vcmask 1047559
        %v384 = vsel %vm383, %v382, %v381
        %v393 = vrot.slane %v341, 7
        %v394 = vsel %vm365, %v393, %v340
        %v395 = vrot.slane %v342, 6
        %v396 = vsel %vm368, %v395, %v394
        %v397 = vrot.slane %v343, 5
        %v398 = vsel %vm371, %v397, %v396
        %v399 = vrot.slane %v344, 4
        %v400 = vsel %vm374, %v399, %v398
        %v401 = vrot.slane %v345, 3
        %v402 = vsel %vm377, %v401, %v400
        %v403 = vrot.slane %v346, 2
        %v404 = vsel %vm380, %v403, %v402
        %v405 = vrot.slane %v347, 1
        %v406 = vsel %vm383, %v405, %v404
        %vm407 = vcmask 261120
        %v408 = vsel %vm407, %v384, 0
        %v410 = vsel %vm407, %v406, 0
        %412 = vmatprep.subr.mxu0 0.0
        %413 = vmatpush1.xpose.msra.mxu0 0.0
        %414 = vmatprep.subr.mxu0 0.0
        %415 = vmatpush1.xpose.msra.mxu0 0.0
        %416 = vmatprep.subr.mxu0 0.0
        %417 = vmatpush1.xpose.msra.mxu0 0.0
        %418 = vmatprep.subr.mxu0 0.0
        %419 = vmatpush1.xpose.msra.mxu0 0.0
        %420 = vmatprep.subr.mxu0 0.0
        %421 = vmatpush1.xpose.msra.mxu0 0.0
        %422 = vmatprep.subr.mxu0 0.0
        %423 = vmatpush1.xpose.msra.mxu0 0.0
        %424 = vmatprep.subr.mxu0 0.0
        %425 = vmatpush1.xpose.msra.mxu0 0.0
        %426 = vmatprep.subr.mxu0 0.0
        %427 = vmatpush1.xpose.msra.mxu0 0.0
        %428 = vmatprep.subr.mxu0 0.0
        %429 = vmatpush1.xpose.msra.mxu0 0.0
        %430 = vmatprep.subr.mxu0 0.0
        %431 = vmatpush1.xpose.msra.mxu0 0.0
        %432 = vmatprep.subr.mxu0 0.0
        %433 = vmatpush1.xpose.msra.mxu0 0.0
        %434 = vmatprep.subr.mxu0 0.0
        %435 = vmatpush1.xpose.msra.mxu0 0.0
        %436 = vmatprep.subr.mxu0 0.0
        %437 = vmatpush1.xpose.msra.mxu0 0.0
        %438 = vmatprep.subr.mxu0 0.0
        %439 = vmatpush1.xpose.msra.mxu0 0.0
        %440 = vmatprep.subr.mxu0 0.0
        %441 = vmatpush1.xpose.msra.mxu0 0.0
        %442 = vmatprep.subr.mxu0 0.0
        %443 = vmatpush1.xpose.msra.mxu0 %v410
        %444 = vmatprep.subr.mxu0 0.0
        %445 = vmatpush2.xpose.msra.mxu0 0.0
        %446 = vmatprep.subr.mxu0 0.0
        %447 = vmatpush2.xpose.msra.mxu0 0.0
        %448 = vmatprep.subr.mxu0 0.0
        %449 = vmatpush2.xpose.msra.mxu0 0.0
        %450 = vmatprep.subr.mxu0 0.0
        %451 = vmatpush2.xpose.msra.mxu0 0.0
        %452 = vmatprep.subr.mxu0 0.0
        %453 = vmatpush2.xpose.msra.mxu0 0.0
        %454 = vmatprep.subr.mxu0 0.0
        %455 = vmatpush2.xpose.msra.mxu0 0.0
        %456 = vmatprep.subr.mxu0 0.0
        %457 = vmatpush2.xpose.msra.mxu0 0.0
        %458 = vmatprep.subr.mxu0 0.0
        %459 = vmatpush2.xpose.msra.mxu0 0.0
        %460 = vmatprep.subr.mxu0 0.0
        %461 = vmatpush2.xpose.msra.mxu0 0.0
        %462 = vmatprep.subr.mxu0 0.0
        %463 = vmatpush2.xpose.msra.mxu0 0.0
        %464 = vmatprep.subr.mxu0 0.0
        %465 = vmatpush2.xpose.msra.mxu0 0.0
        %466 = vmatprep.subr.mxu0 0.0
        %467 = vmatpush2.xpose.msra.mxu0 0.0
        %468 = vmatprep.subr.mxu0 0.0
        %469 = vmatpush2.xpose.msra.mxu0 0.0
        %470 = vmatprep.subr.mxu0 0.0
        %471 = vmatpush2.xpose.msra.mxu0 0.0
        %472 = vmatprep.subr.mxu0 0.0
        %473 = vmatpush2.xpose.msra.mxu0 0.0
        %474 = vmatprep.subr.mxu0 0.0
        %475 = vmatpush2.xpose.msra.mxu0 0.0
        %476 = vmatprep.mubr.f32.mxu0 0.0
        %477 = vmatmul.mubr.f32.gmra.mxu0 %v408
        %v478 = vpop.f32.mrf.mxu0
        %v479 = vadd.f32 0.0, %v478
        %v480 = vpop.f32.mrf.mxu0
        %481 = vdwg.mxu0
        %v482 = vld [vmem:[#allocation2] sm:$0xff]
        %vm483 = vcmask 64512
        %v484 = vsel %vm483, %v479, -inf
        %485 = vmax.xlane.f32.xlu0 %v484
        %v486 = vpop.xlane.xlu0 %485
        %v487 = vmax.f32 %v482, %v486
        %v488 = vsub.f32 %v482, %v487
        %v489 = vmul.f32 %v488, 1.442695
        %v490 = vpow.pop %v489
        %492 = vset.pattern.permute.xlu0 0
        %493 = vperm.xlu0 %492, %v487
        %v494 = vpop.permute.xlu0 %493
        %v496 = vsub.f32 %v479, %v494
        %v497 = vmul.f32 %v496, 1.442695
        %v498 = vpow.pop %v497
        %v499 = vld [vmem:[#allocation3] sm:$0xff]
        %v500 = vmul.f32 %v490, %v499
        %v501 = vsel %vm483, %v498, 0.0
        %502 = vadd.xlane.f32.xlu0 %v501
        %v503 = vpop.xlane.xlu0 %502
        %v504 = vadd.f32 %v500, %v503
        %vm505 = vcmask 7168
        %506 = vst.msk [vmem:[#allocation3] sm:$0xff] %vm505, %v504
        %v507 = vld [vmem:[#allocation4] sm:$0xff]
        %509 = vset.pattern.permute.xlu0 0
        %510 = vperm.xlu0 %509, %v490
        %v511 = vpop.permute.xlu0 %510
        %v513 = vmul.f32 %v511, %v507
        %v522 = vrot.slane %v349, 7
        %v523 = vsel %vm365, %v522, %v348
        %v524 = vrot.slane %v350, 6
        %v525 = vsel %vm368, %v524, %v523
        %v526 = vrot.slane %v351, 5
        %v527 = vsel %vm371, %v526, %v525
        %v528 = vrot.slane %v352, 4
        %v529 = vsel %vm374, %v528, %v527
        %v530 = vrot.slane %v353, 3
        %v531 = vsel %vm377, %v530, %v529
        %v532 = vrot.slane %v354, 2
        %v533 = vsel %vm380, %v532, %v531
        %v534 = vrot.slane %v355, 1
        %v535 = vsel %vm383, %v534, %v533
        %v538 = vsel %vm483, %v498, 0
        %540 = vmatprep.subr.mxu0 0.0
        %541 = vmatpush1.msra.mxu0 0.0
        %542 = vmatprep.subr.mxu0 0.0
        %543 = vmatpush1.msra.mxu0 0.0
        %544 = vmatprep.subr.mxu0 0.0
        %545 = vmatpush1.msra.mxu0 0.0
        %546 = vmatprep.subr.mxu0 0.0
        %547 = vmatpush1.msra.mxu0 0.0
        %548 = vmatprep.subr.mxu0 0.0
        %549 = vmatpush1.msra.mxu0 0.0
        %550 = vmatprep.subr.mxu0 0.0
        %551 = vmatpush1.msra.mxu0 0.0
        %552 = vmatprep.subr.mxu0 0.0
        %553 = vmatpush1.msra.mxu0 0.0
        %554 = vmatprep.subr.mxu0 0.0
        %555 = vmatpush1.msra.mxu0 0.0
        %556 = vmatprep.subr.mxu0 0.0
        %557 = vmatpush1.msra.mxu0 0.0
        %558 = vmatprep.subr.mxu0 0.0
        %559 = vmatpush1.msra.mxu0 0.0
        %560 = vmatprep.subr.mxu0 0.0
        %561 = vmatpush1.msra.mxu0 0.0
        %562 = vmatprep.subr.mxu0 0.0
        %563 = vmatpush1.msra.mxu0 0.0
        %564 = vmatprep.subr.mxu0 0.0
        %565 = vmatpush1.msra.mxu0 0.0
        %566 = vmatprep.subr.mxu0 0.0
        %567 = vmatpush1.msra.mxu0 0.0
        %568 = vmatprep.subr.mxu0 0.0
        %569 = vmatpush1.msra.mxu0 0.0
        %570 = vmatprep.subr.mxu0 0.0
        %571 = vmatpush1.msra.mxu0 %v535
        %572 = vmatprep.subr.mxu0 0.0
        %573 = vmatpush2.msra.mxu0 0.0
        %574 = vmatprep.subr.mxu0 0.0
        %575 = vmatpush2.msra.mxu0 0.0
        %576 = vmatprep.subr.mxu0 0.0
        %577 = vmatpush2.msra.mxu0 0.0
        %578 = vmatprep.subr.mxu0 0.0
        %579 = vmatpush2.msra.mxu0 0.0
        %580 = vmatprep.subr.mxu0 0.0
        %581 = vmatpush2.msra.mxu0 0.0
        %582 = vmatprep.subr.mxu0 0.0
        %583 = vmatpush2.msra.mxu0 0.0
        %584 = vmatprep.subr.mxu0 0.0
        %585 = vmatpush2.msra.mxu0 0.0
        %586 = vmatprep.subr.mxu0 0.0
        %587 = vmatpush2.msra.mxu0 0.0
        %588 = vmatprep.subr.mxu0 0.0
        %589 = vmatpush2.msra.mxu0 0.0
        %590 = vmatprep.subr.mxu0 0.0
        %591 = vmatpush2.msra.mxu0 0.0
        %592 = vmatprep.subr.mxu0 0.0
        %593 = vmatpush2.msra.mxu0 0.0
        %594 = vmatprep.subr.mxu0 0.0
        %595 = vmatpush2.msra.mxu0 0.0
        %596 = vmatprep.subr.mxu0 0.0
        %597 = vmatpush2.msra.mxu0 0.0
        %598 = vmatprep.subr.mxu0 0.0
        %599 = vmatpush2.msra.mxu0 0.0
        %600 = vmatprep.subr.mxu0 0.0
        %601 = vmatpush2.msra.mxu0 0.0
        %602 = vmatprep.subr.mxu0 0.0
        %603 = vmatpush2.msra.mxu0 0.0
        %604 = vmatprep.mubr.f32.mxu0 0.0
        %605 = vmatmul.mubr.f32.gmra.mxu0 %v538
        %v606 = vpop.f32.mrf.mxu0
        %v607 = vadd.f32 0.0, %v606
        %v608 = vpop.f32.mrf.mxu0
        %609 = vdwg.mxu0
        %v610 = vadd.f32 %v513, %v607
        %611 = vst.msk [vmem:[#allocation4] sm:$0xff] %vm407, %v610
        %612 = vst.msk [vmem:[#allocation2] sm:$0xff] %vm505, %v487
        %v613 = vld [vmem:[%s251 + $0x1] sm:$0x1]
        %v614 = vld [vmem:[%s251 + $0x5] sm:$0x1]
        %v615 = vld [vmem:[%s251 + $0x9] sm:$0x1]
        %v616 = vld [vmem:[%s251 + $0xd] sm:$0x1]
        %v617 = vld [vmem:[%s251 + $0x11] sm:$0x1]
        %v618 = vld [vmem:[%s251 + $0x15] sm:$0x1]
        %v619 = vld [vmem:[%s251 + $0x19] sm:$0x1]
        %v620 = vld [vmem:[%s251 + $0x1d] sm:$0x1]
        %v621 = vmul.f32 %v613, 0.17677669
        %v622 = vmul.f32 %v614, 0.17677669
        %v623 = vmul.f32 %v615, 0.17677669
        %v624 = vmul.f32 %v616, 0.17677669
        %v625 = vmul.f32 %v617, 0.17677669
        %v626 = vmul.f32 %v618, 0.17677669
        %v627 = vmul.f32 %v619, 0.17677669
        %v628 = vmul.f32 %v620, 0.17677669
        %v629 = vld [vmem:[%s260 + $0x1] sm:$0x1]
        %v630 = vld [vmem:[%s260 + $0x5] sm:$0x1]
        %v631 = vld [vmem:[%s260 + $0x9] sm:$0x1]
        %v632 = vld [vmem:[%s260 + $0xd] sm:$0x1]
        %v633 = vld [vmem:[%s260 + $0x11] sm:$0x1]
        %v634 = vld [vmem:[%s260 + $0x15] sm:$0x1]
        %v635 = vld [vmem:[%s260 + $0x19] sm:$0x1]
        %v636 = vld [vmem:[%s260 + $0x1d] sm:$0x1]
        %v637 = vld [vmem:[%s269 + $0x1] sm:$0x1]
        %v638 = vld [vmem:[%s269 + $0x5] sm:$0x1]
        %v639 = vld [vmem:[%s269 + $0x9] sm:$0x1]
        %v640 = vld [vmem:[%s269 + $0xd] sm:$0x1]
        %v641 = vld [vmem:[%s269 + $0x11] sm:$0x1]
        %v642 = vld [vmem:[%s269 + $0x15] sm:$0x1]
        %v643 = vld [vmem:[%s269 + $0x19] sm:$0x1]
        %v644 = vld [vmem:[%s269 + $0x1d] sm:$0x1]
        %v653 = vrot.slane %v622, 7
        %v654 = vsel %vm365, %v653, %v621
        %v655 = vrot.slane %v623, 6
        %v656 = vsel %vm368, %v655, %v654
        %v657 = vrot.slane %v624, 5
        %v658 = vsel %vm371, %v657, %v656
        %v659 = vrot.slane %v625, 4
        %v660 = vsel %vm374, %v659, %v658
        %v661 = vrot.slane %v626, 3
        %v662 = vsel %vm377, %v661, %v660
        %v663 = vrot.slane %v627, 2
        %v664 = vsel %vm380, %v663, %v662
        %v665 = vrot.slane %v628, 1
        %v666 = vsel %vm383, %v665, %v664
        %v675 = vrot.slane %v630, 7
        %v676 = vsel %vm365, %v675, %v629
        %v677 = vrot.slane %v631, 6
        %v678 = vsel %vm368, %v677, %v676
        %v679 = vrot.slane %v632, 5
        %v680 = vsel %vm371, %v679, %v678
        %v681 = vrot.slane %v633, 4
        %v682 = vsel %vm374, %v681, %v680
        %v683 = vrot.slane %v634, 3
        %v684 = vsel %vm377, %v683, %v682
        %v685 = vrot.slane %v635, 2
        %v686 = vsel %vm380, %v685, %v684
        %v687 = vrot.slane %v636, 1
        %v688 = vsel %vm383, %v687, %v686
        %v689 = vsel %vm407, %v666, 0
        %v691 = vsel %vm407, %v688, 0
        %693 = vmatprep.subr.mxu0 0.0
        %694 = vmatpush1.xpose.msra.mxu0 0.0
        %695 = vmatprep.subr.mxu0 0.0
        %696 = vmatpush1.xpose.msra.mxu0 0.0
        %697 = vmatprep.subr.mxu0 0.0
        %698 = vmatpush1.xpose.msra.mxu0 0.0
        %699 = vmatprep.subr.mxu0 0.0
        %700 = vmatpush1.xpose.msra.mxu0 0.0
        %701 = vmatprep.subr.mxu0 0.0
        %702 = vmatpush1.xpose.msra.mxu0 0.0
        %703 = vmatprep.subr.mxu0 0.0
        %704 = vmatpush1.xpose.msra.mxu0 0.0
        %705 = vmatprep.subr.mxu0 0.0
        %706 = vmatpush1.xpose.msra.mxu0 0.0
        %707 = vmatprep.subr.mxu0 0.0
        %708 = vmatpush1.xpose.msra.mxu0 0.0
        %709 = vmatprep.subr.mxu0 0.0
        %710 = vmatpush1.xpose.msra.mxu0 0.0
        %711 = vmatprep.subr.mxu0 0.0
        %712 = vmatpush1.xpose.msra.mxu0 0.0
        %713 = vmatprep.subr.mxu0 0.0
        %714 = vmatpush1.xpose.msra.mxu0 0.0
        %715 = vmatprep.subr.mxu0 0.0
        %716 = vmatpush1.xpose.msra.mxu0 0.0
        %717 = vmatprep.subr.mxu0 0.0
        %718 = vmatpush1.xpose.msra.mxu0 0.0
        %719 = vmatprep.subr.mxu0 0.0
        %720 = vmatpush1.xpose.msra.mxu0 0.0
        %721 = vmatprep.subr.mxu0 0.0
        %722 = vmatpush1.xpose.msra.mxu0 0.0
        %723 = vmatprep.subr.mxu0 0.0
        %724 = vmatpush1.xpose.msra.mxu0 %v691
        %725 = vmatprep.subr.mxu0 0.0
        %726 = vmatpush2.xpose.msra.mxu0 0.0
        %727 = vmatprep.subr.mxu0 0.0
        %728 = vmatpush2.xpose.msra.mxu0 0.0
        %729 = vmatprep.subr.mxu0 0.0
        %730 = vmatpush2.xpose.msra.mxu0 0.0
        %731 = vmatprep.subr.mxu0 0.0
        %732 = vmatpush2.xpose.msra.mxu0 0.0
        %733 = vmatprep.subr.mxu0 0.0
        %734 = vmatpush2.xpose.msra.mxu0 0.0
        %735 = vmatprep.subr.mxu0 0.0
        %736 = vmatpush2.xpose.msra.mxu0 0.0
        %737 = vmatprep.subr.mxu0 0.0
        %738 = vmatpush2.xpose.msra.mxu0 0.0
        %739 = vmatprep.subr.mxu0 0.0
        %740 = vmatpush2.xpose.msra.mxu0 0.0
        %741 = vmatprep.subr.mxu0 0.0
        %742 = vmatpush2.xpose.msra.mxu0 0.0
        %743 = vmatprep.subr.mxu0 0.0
        %744 = vmatpush2.xpose.msra.mxu0 0.0
        %745 = vmatprep.subr.mxu0 0.0
        %746 = vmatpush2.xpose.msra.mxu0 0.0
        %747 = vmatprep.subr.mxu0 0.0
        %748 = vmatpush2.xpose.msra.mxu0 0.0
        %749 = vmatprep.subr.mxu0 0.0
        %750 = vmatpush2.xpose.msra.mxu0 0.0
        %751 = vmatprep.subr.mxu0 0.0
        %752 = vmatpush2.xpose.msra.mxu0 0.0
        %753 = vmatprep.subr.mxu0 0.0
        %754 = vmatpush2.xpose.msra.mxu0 0.0
        %755 = vmatprep.subr.mxu0 0.0
        %756 = vmatpush2.xpose.msra.mxu0 0.0
        %757 = vmatprep.mubr.f32.mxu0 0.0
        %758 = vmatmul.mubr.f32.gmra.mxu0 %v689
        %v759 = vpop.f32.mrf.mxu0
        %v760 = vadd.f32 0.0, %v759
        %v761 = vpop.f32.mrf.mxu0
        %762 = vdwg.mxu0
        %s763 = scalar_lea.vmem [#allocation2], 8
        %v764 = vld [vmem:[%s763] sm:$0xff]
        %v765 = vsel %vm483, %v760, -inf
        %766 = vmax.xlane.f32.xlu0 %v765
        %v767 = vpop.xlane.xlu0 %766
        %v768 = vmax.f32 %v764, %v767
        %v769 = vsub.f32 %v764, %v768
        %v770 = vmul.f32 %v769, 1.442695
        %v771 = vpow.pop %v770
        %773 = vset.pattern.permute.xlu0 0
        %774 = vperm.xlu0 %773, %v768
        %v775 = vpop.permute.xlu0 %774
        %v777 = vsub.f32 %v760, %v775
        %v778 = vmul.f32 %v777, 1.442695
        %v779 = vpow.pop %v778
        %s780 = scalar_lea.vmem [#allocation3], 8
        %v781 = vld [vmem:[%s780] sm:$0xff]
        %v782 = vmul.f32 %v771, %v781
        %v783 = vsel %vm483, %v779, 0.0
        %784 = vadd.xlane.f32.xlu0 %v783
        %v785 = vpop.xlane.xlu0 %784
        %v786 = vadd.f32 %v782, %v785
        %787 = vst.msk [vmem:[%s780] sm:$0xff] %vm505, %v786
        %s788 = scalar_lea.vmem [#allocation4], 8
        %v789 = vld [vmem:[%s788] sm:$0xff]
        %791 = vset.pattern.permute.xlu0 0
        %792 = vperm.xlu0 %791, %v771
        %v793 = vpop.permute.xlu0 %792
        %v795 = vmul.f32 %v793, %v789
        %v804 = vrot.slane %v638, 7
        %v805 = vsel %vm365, %v804, %v637
        %v806 = vrot.slane %v639, 6
        %v807 = vsel %vm368, %v806, %v805
        %v808 = vrot.slane %v640, 5
        %v809 = vsel %vm371, %v808, %v807
        %v810 = vrot.slane %v641, 4
        %v811 = vsel %vm374, %v810, %v809
        %v812 = vrot.slane %v642, 3
        %v813 = vsel %vm377, %v812, %v811
        %v814 = vrot.slane %v643, 2
        %v815 = vsel %vm380, %v814, %v813
        %v816 = vrot.slane %v644, 1
        %v817 = vsel %vm383, %v816, %v815
        %v820 = vsel %vm483, %v779, 0
        %822 = vmatprep.subr.mxu0 0.0
        %823 = vmatpush1.msra.mxu0 0.0
        %824 = vmatprep.subr.mxu0 0.0
        %825 = vmatpush1.msra.mxu0 0.0
        %826 = vmatprep.subr.mxu0 0.0
        %827 = vmatpush1.msra.mxu0 0.0
        %828 = vmatprep.subr.mxu0 0.0
        %829 = vmatpush1.msra.mxu0 0.0
        %830 = vmatprep.subr.mxu0 0.0
        %831 = vmatpush1.msra.mxu0 0.0
        %832 = vmatprep.subr.mxu0 0.0
        %833 = vmatpush1.msra.mxu0 0.0
        %834 = vmatprep.subr.mxu0 0.0
        %835 = vmatpush1.msra.mxu0 0.0
        %836 = vmatprep.subr.mxu0 0.0
        %837 = vmatpush1.msra.mxu0 0.0
        %838 = vmatprep.subr.mxu0 0.0
        %839 = vmatpush1.msra.mxu0 0.0
        %840 = vmatprep.subr.mxu0 0.0
        %841 = vmatpush1.msra.mxu0 0.0
        %842 = vmatprep.subr.mxu0 0.0
        %843 = vmatpush1.msra.mxu0 0.0
        %844 = vmatprep.subr.mxu0 0.0
        %845 = vmatpush1.msra.mxu0 0.0
        %846 = vmatprep.subr.mxu0 0.0
        %847 = vmatpush1.msra.mxu0 0.0
        %848 = vmatprep.subr.mxu0 0.0
        %849 = vmatpush1.msra.mxu0 0.0
        %850 = vmatprep.subr.mxu0 0.0
        %851 = vmatpush1.msra.mxu0 0.0
        %852 = vmatprep.subr.mxu0 0.0
        %853 = vmatpush1.msra.mxu0 %v817
        %854 = vmatprep.subr.mxu0 0.0
        %855 = vmatpush2.msra.mxu0 0.0
        %856 = vmatprep.subr.mxu0 0.0
        %857 = vmatpush2.msra.mxu0 0.0
        %858 = vmatprep.subr.mxu0 0.0
        %859 = vmatpush2.msra.mxu0 0.0
        %860 = vmatprep.subr.mxu0 0.0
        %861 = vmatpush2.msra.mxu0 0.0
        %862 = vmatprep.subr.mxu0 0.0
        %863 = vmatpush2.msra.mxu0 0.0
        %864 = vmatprep.subr.mxu0 0.0
        %865 = vmatpush2.msra.mxu0 0.0
        %866 = vmatprep.subr.mxu0 0.0
        %867 = vmatpush2.msra.mxu0 0.0
        %868 = vmatprep.subr.mxu0 0.0
        %869 = vmatpush2.msra.mxu0 0.0
        %870 = vmatprep.subr.mxu0 0.0
        %871 = vmatpush2.msra.mxu0 0.0
        %872 = vmatprep.subr.mxu0 0.0
        %873 = vmatpush2.msra.mxu0 0.0
        %874 = vmatprep.subr.mxu0 0.0
        %875 = vmatpush2.msra.mxu0 0.0
        %876 = vmatprep.subr.mxu0 0.0
        %877 = vmatpush2.msra.mxu0 0.0
        %878 = vmatprep.subr.mxu0 0.0
        %879 = vmatpush2.msra.mxu0 0.0
        %880 = vmatprep.subr.mxu0 0.0
        %881 = vmatpush2.msra.mxu0 0.0
        %882 = vmatprep.subr.mxu0 0.0
        %883 = vmatpush2.msra.mxu0 0.0
        %884 = vmatprep.subr.mxu0 0.0
        %885 = vmatpush2.msra.mxu0 0.0
        %886 = vmatprep.mubr.f32.mxu0 0.0
        %887 = vmatmul.mubr.f32.gmra.mxu0 %v820
        %v888 = vpop.f32.mrf.mxu0
        %v889 = vadd.f32 0.0, %v888
        %v890 = vpop.f32.mrf.mxu0
        %891 = vdwg.mxu0
        %v892 = vadd.f32 %v795, %v889
        %893 = vst.msk [vmem:[%s788] sm:$0xff] %vm407, %v892
        %894 = vst.msk [vmem:[%s763] sm:$0xff] %vm505, %v768
        %v895 = vld [vmem:[%s251 + $0x2] sm:$0x1]
        %v896 = vld [vmem:[%s251 + $0x6] sm:$0x1]
        %v897 = vld [vmem:[%s251 + $0xa] sm:$0x1]
        %v898 = vld [vmem:[%s251 + $0xe] sm:$0x1]
        %v899 = vld [vmem:[%s251 + $0x12] sm:$0x1]
        %v900 = vld [vmem:[%s251 + $0x16] sm:$0x1]
        %v901 = vld [vmem:[%s251 + $0x1a] sm:$0x1]
        %v902 = vld [vmem:[%s251 + $0x1e] sm:$0x1]
        %v903 = vmul.f32 %v895, 0.17677669
        %v904 = vmul.f32 %v896, 0.17677669
        %v905 = vmul.f32 %v897, 0.17677669
        %v906 = vmul.f32 %v898, 0.17677669
        %v907 = vmul.f32 %v899, 0.17677669
        %v908 = vmul.f32 %v900, 0.17677669
        %v909 = vmul.f32 %v901, 0.17677669
        %v910 = vmul.f32 %v902, 0.17677669
        %v911 = vld [vmem:[%s260 + $0x2] sm:$0x1]
        %v912 = vld [vmem:[%s260 + $0x6] sm:$0x1]
        %v913 = vld [vmem:[%s260 + $0xa] sm:$0x1]
        %v914 = vld [vmem:[%s260 + $0xe] sm:$0x1]
        %v915 = vld [vmem:[%s260 + $0x12] sm:$0x1]
        %v916 = vld [vmem:[%s260 + $0x16] sm:$0x1]
        %v917 = vld [vmem:[%s260 + $0x1a] sm:$0x1]
        %v918 = vld [vmem:[%s260 + $0x1e] sm:$0x1]
        %v919 = vld [vmem:[%s269 + $0x2] sm:$0x1]
        %v920 = vld [vmem:[%s269 + $0x6] sm:$0x1]
        %v921 = vld [vmem:[%s269 + $0xa] sm:$0x1]
        %v922 = vld [vmem:[%s269 + $0xe] sm:$0x1]
        %v923 = vld [vmem:[%s269 + $0x12] sm:$0x1]
        %v924 = vld [vmem:[%s269 + $0x16] sm:$0x1]
        %v925 = vld [vmem:[%s269 + $0x1a] sm:$0x1]
        %v926 = vld [vmem:[%s269 + $0x1e] sm:$0x1]
        %v935 = vrot.slane %v904, 7
        %v936 = vsel %vm365, %v935, %v903
        %v937 = vrot.slane %v905, 6
        %v938 = vsel %vm368, %v937, %v936
        %v939 = vrot.slane %v906, 5
        %v940 = vsel %vm371, %v939, %v938
        %v941 = vrot.slane %v907, 4
        %v942 = vsel %vm374, %v941, %v940
        %v943 = vrot.slane %v908, 3
        %v944 = vsel %vm377, %v943, %v942
        %v945 = vrot.slane %v909, 2
        %v946 = vsel %vm380, %v945, %v944
        %v947 = vrot.slane %v910, 1
        %v948 = vsel %vm383, %v947, %v946
        %v957 = vrot.slane %v912, 7
        %v958 = vsel %vm365, %v957, %v911
        %v959 = vrot.slane %v913, 6
        %v960 = vsel %vm368, %v959, %v958
        %v961 = vrot.slane %v914, 5
        %v962 = vsel %vm371, %v961, %v960
        %v963 = vrot.slane %v915, 4
        %v964 = vsel %vm374, %v963, %v962
        %v965 = vrot.slane %v916, 3
        %v966 = vsel %vm377, %v965, %v964
        %v967 = vrot.slane %v917, 2
        %v968 = vsel %vm380, %v967, %v966
        %v969 = vrot.slane %v918, 1
        %v970 = vsel %vm383, %v969, %v968
        %v971 = vsel %vm407, %v948, 0
        %v973 = vsel %vm407, %v970, 0
        %975 = vmatprep.subr.mxu0 0.0
        %976 = vmatpush1.xpose.msra.mxu0 0.0
        %977 = vmatprep.subr.mxu0 0.0
        %978 = vmatpush1.xpose.msra.mxu0 0.0
        %979 = vmatprep.subr.mxu0 0.0
        %980 = vmatpush1.xpose.msra.mxu0 0.0
        %981 = vmatprep.subr.mxu0 0.0
        %982 = vmatpush1.xpose.msra.mxu0 0.0
        %983 = vmatprep.subr.mxu0 0.0
        %984 = vmatpush1.xpose.msra.mxu0 0.0
        %985 = vmatprep.subr.mxu0 0.0
        %986 = vmatpush1.xpose.msra.mxu0 0.0
        %987 = vmatprep.subr.mxu0 0.0
        %988 = vmatpush1.xpose.msra.mxu0 0.0
        %989 = vmatprep.subr.mxu0 0.0
        %990 = vmatpush1.xpose.msra.mxu0 0.0
        %991 = vmatprep.subr.mxu0 0.0
        %992 = vmatpush1.xpose.msra.mxu0 0.0
        %993 = vmatprep.subr.mxu0 0.0
        %994 = vmatpush1.xpose.msra.mxu0 0.0
        %995 = vmatprep.subr.mxu0 0.0
        %996 = vmatpush1.xpose.msra.mxu0 0.0
        %997 = vmatprep.subr.mxu0 0.0
        %998 = vmatpush1.xpose.msra.mxu0 0.0
        %999 = vmatprep.subr.mxu0 0.0
        %1000 = vmatpush1.xpose.msra.mxu0 0.0
        %1001 = vmatprep.subr.mxu0 0.0
        %1002 = vmatpush1.xpose.msra.mxu0 0.0
        %1003 = vmatprep.subr.mxu0 0.0
        %1004 = vmatpush1.xpose.msra.mxu0 0.0
        %1005 = vmatprep.subr.mxu0 0.0
        %1006 = vmatpush1.xpose.msra.mxu0 %v973
        %1007 = vmatprep.subr.mxu0 0.0
        %1008 = vmatpush2.xpose.msra.mxu0 0.0
        %1009 = vmatprep.subr.mxu0 0.0
        %1010 = vmatpush2.xpose.msra.mxu0 0.0
        %1011 = vmatprep.subr.mxu0 0.0
        %1012 = vmatpush2.xpose.msra.mxu0 0.0
        %1013 = vmatprep.subr.mxu0 0.0
        %1014 = vmatpush2.xpose.msra.mxu0 0.0
        %1015 = vmatprep.subr.mxu0 0.0
        %1016 = vmatpush2.xpose.msra.mxu0 0.0
        %1017 = vmatprep.subr.mxu0 0.0
        %1018 = vmatpush2.xpose.msra.mxu0 0.0
        %1019 = vmatprep.subr.mxu0 0.0
        %1020 = vmatpush2.xpose.msra.mxu0 0.0
        %1021 = vmatprep.subr.mxu0 0.0
        %1022 = vmatpush2.xpose.msra.mxu0 0.0
        %1023 = vmatprep.subr.mxu0 0.0
        %1024 = vmatpush2.xpose.msra.mxu0 0.0
        %1025 = vmatprep.subr.mxu0 0.0
        %1026 = vmatpush2.xpose.msra.mxu0 0.0
        %1027 = vmatprep.subr.mxu0 0.0
        %1028 = vmatpush2.xpose.msra.mxu0 0.0
        %1029 = vmatprep.subr.mxu0 0.0
        %1030 = vmatpush2.xpose.msra.mxu0 0.0
        %1031 = vmatprep.subr.mxu0 0.0
        %1032 = vmatpush2.xpose.msra.mxu0 0.0
        %1033 = vmatprep.subr.mxu0 0.0
        %1034 = vmatpush2.xpose.msra.mxu0 0.0
        %1035 = vmatprep.subr.mxu0 0.0
        %1036 = vmatpush2.xpose.msra.mxu0 0.0
        %1037 = vmatprep.subr.mxu0 0.0
        %1038 = vmatpush2.xpose.msra.mxu0 0.0
        %1039 = vmatprep.mubr.f32.mxu0 0.0
        %1040 = vmatmul.mubr.f32.gmra.mxu0 %v971
        %v1041 = vpop.f32.mrf.mxu0
        %v1042 = vadd.f32 0.0, %v1041
        %v1043 = vpop.f32.mrf.mxu0
        %1044 = vdwg.mxu0
        %s1045 = scalar_lea.vmem [#allocation2], 16
        %v1046 = vld [vmem:[%s1045] sm:$0xff]
        %v1047 = vsel %vm483, %v1042, -inf
        %1048 = vmax.xlane.f32.xlu0 %v1047
        %v1049 = vpop.xlane.xlu0 %1048
        %v1050 = vmax.f32 %v1046, %v1049
        %v1051 = vsub.f32 %v1046, %v1050
        %v1052 = vmul.f32 %v1051, 1.442695
        %v1053 = vpow.pop %v1052
        %1055 = vset.pattern.permute.xlu0 0
        %1056 = vperm.xlu0 %1055, %v1050
        %v1057 = vpop.permute.xlu0 %1056
        %v1059 = vsub.f32 %v1042, %v1057
        %v1060 = vmul.f32 %v1059, 1.442695
        %v1061 = vpow.pop %v1060
        %s1062 = scalar_lea.vmem [#allocation3], 16
        %v1063 = vld [vmem:[%s1062] sm:$0xff]
        %v1064 = vmul.f32 %v1053, %v1063
        %v1065 = vsel %vm483, %v1061, 0.0
        %1066 = vadd.xlane.f32.xlu0 %v1065
        %v1067 = vpop.xlane.xlu0 %1066
        %v1068 = vadd.f32 %v1064, %v1067
        %1069 = vst.msk [vmem:[%s1062] sm:$0xff] %vm505, %v1068
        %s1070 = scalar_lea.vmem [#allocation4], 16
        %v1071 = vld [vmem:[%s1070] sm:$0xff]
        %1073 = vset.pattern.permute.xlu0 0
        %1074 = vperm.xlu0 %1073, %v1053
        %v1075 = vpop.permute.xlu0 %1074
        %v1077 = vmul.f32 %v1075, %v1071
        %v1086 = vrot.slane %v920, 7
        %v1087 = vsel %vm365, %v1086, %v919
        %v1088 = vrot.slane %v921, 6
        %v1089 = vsel %vm368, %v1088, %v1087
        %v1090 = vrot.slane %v922, 5
        %v1091 = vsel %vm371, %v1090, %v1089
        %v1092 = vrot.slane %v923, 4
        %v1093 = vsel %vm374, %v1092, %v1091
        %v1094 = vrot.slane %v924, 3
        %v1095 = vsel %vm377, %v1094, %v1093
        %v1096 = vrot.slane %v925, 2
        %v1097 = vsel %vm380, %v1096, %v1095
        %v1098 = vrot.slane %v926, 1
        %v1099 = vsel %vm383, %v1098, %v1097
        %v1102 = vsel %vm483, %v1061, 0
        %1104 = vmatprep.subr.mxu0 0.0
        %1105 = vmatpush1.msra.mxu0 0.0
        %1106 = vmatprep.subr.mxu0 0.0
        %1107 = vmatpush1.msra.mxu0 0.0
        %1108 = vmatprep.subr.mxu0 0.0
        %1109 = vmatpush1.msra.mxu0 0.0
        %1110 = vmatprep.subr.mxu0 0.0
        %1111 = vmatpush1.msra.mxu0 0.0
        %1112 = vmatprep.subr.mxu0 0.0
        %1113 = vmatpush1.msra.mxu0 0.0
        %1114 = vmatprep.subr.mxu0 0.0
        %1115 = vmatpush1.msra.mxu0 0.0
        %1116 = vmatprep.subr.mxu0 0.0
        %1117 = vmatpush1.msra.mxu0 0.0
        %1118 = vmatprep.subr.mxu0 0.0
        %1119 = vmatpush1.msra.mxu0 0.0
        %1120 = vmatprep.subr.mxu0 0.0
        %1121 = vmatpush1.msra.mxu0 0.0
        %1122 = vmatprep.subr.mxu0 0.0
        %1123 = vmatpush1.msra.mxu0 0.0
        %1124 = vmatprep.subr.mxu0 0.0
        %1125 = vmatpush1.msra.mxu0 0.0
        %1126 = vmatprep.subr.mxu0 0.0
        %1127 = vmatpush1.msra.mxu0 0.0
        %1128 = vmatprep.subr.mxu0 0.0
        %1129 = vmatpush1.msra.mxu0 0.0
        %1130 = vmatprep.subr.mxu0 0.0
        %1131 = vmatpush1.msra.mxu0 0.0
        %1132 = vmatprep.subr.mxu0 0.0
        %1133 = vmatpush1.msra.mxu0 0.0
        %1134 = vmatprep.subr.mxu0 0.0
        %1135 = vmatpush1.msra.mxu0 %v1099
        %1136 = vmatprep.subr.mxu0 0.0
        %1137 = vmatpush2.msra.mxu0 0.0
        %1138 = vmatprep.subr.mxu0 0.0
        %1139 = vmatpush2.msra.mxu0 0.0
        %1140 = vmatprep.subr.mxu0 0.0
        %1141 = vmatpush2.msra.mxu0 0.0
        %1142 = vmatprep.subr.mxu0 0.0
        %1143 = vmatpush2.msra.mxu0 0.0
        %1144 = vmatprep.subr.mxu0 0.0
        %1145 = vmatpush2.msra.mxu0 0.0
        %1146 = vmatprep.subr.mxu0 0.0
        %1147 = vmatpush2.msra.mxu0 0.0
        %1148 = vmatprep.subr.mxu0 0.0
        %1149 = vmatpush2.msra.mxu0 0.0
        %1150 = vmatprep.subr.mxu0 0.0
        %1151 = vmatpush2.msra.mxu0 0.0
        %1152 = vmatprep.subr.mxu0 0.0
        %1153 = vmatpush2.msra.mxu0 0.0
        %1154 = vmatprep.subr.mxu0 0.0
        %1155 = vmatpush2.msra.mxu0 0.0
        %1156 = vmatprep.subr.mxu0 0.0
        %1157 = vmatpush2.msra.mxu0 0.0
        %1158 = vmatprep.subr.mxu0 0.0
        %1159 = vmatpush2.msra.mxu0 0.0
        %1160 = vmatprep.subr.mxu0 0.0
        %1161 = vmatpush2.msra.mxu0 0.0
        %1162 = vmatprep.subr.mxu0 0.0
        %1163 = vmatpush2.msra.mxu0 0.0
        %1164 = vmatprep.subr.mxu0 0.0
        %1165 = vmatpush2.msra.mxu0 0.0
        %1166 = vmatprep.subr.mxu0 0.0
        %1167 = vmatpush2.msra.mxu0 0.0
        %1168 = vmatprep.mubr.f32.mxu0 0.0
        %1169 = vmatmul.mubr.f32.gmra.mxu0 %v1102
        %v1170 = vpop.f32.mrf.mxu0
        %v1171 = vadd.f32 0.0, %v1170
        %v1172 = vpop.f32.mrf.mxu0
        %1173 = vdwg.mxu0
        %v1174 = vadd.f32 %v1077, %v1171
        %1175 = vst.msk [vmem:[%s1070] sm:$0xff] %vm407, %v1174
        %1176 = vst.msk [vmem:[%s1045] sm:$0xff] %vm505, %v1050
        %v1177 = vld [vmem:[%s251 + $0x3] sm:$0x1]
        %v1178 = vld [vmem:[%s251 + $0x7] sm:$0x1]
        %v1179 = vld [vmem:[%s251 + $0xb] sm:$0x1]
        %v1180 = vld [vmem:[%s251 + $0xf] sm:$0x1]
        %v1181 = vld [vmem:[%s251 + $0x13] sm:$0x1]
        %v1182 = vld [vmem:[%s251 + $0x17] sm:$0x1]
        %v1183 = vld [vmem:[%s251 + $0x1b] sm:$0x1]
        %v1184 = vld [vmem:[%s251 + $0x1f] sm:$0x1]
        %v1185 = vmul.f32 %v1177, 0.17677669
        %v1186 = vmul.f32 %v1178, 0.17677669
        %v1187 = vmul.f32 %v1179, 0.17677669
        %v1188 = vmul.f32 %v1180, 0.17677669
        %v1189 = vmul.f32 %v1181, 0.17677669
        %v1190 = vmul.f32 %v1182, 0.17677669
        %v1191 = vmul.f32 %v1183, 0.17677669
        %v1192 = vmul.f32 %v1184, 0.17677669
        %v1193 = vld [vmem:[%s260 + $0x3] sm:$0x1]
        %v1194 = vld [vmem:[%s260 + $0x7] sm:$0x1]
        %v1195 = vld [vmem:[%s260 + $0xb] sm:$0x1]
        %v1196 = vld [vmem:[%s260 + $0xf] sm:$0x1]
        %v1197 = vld [vmem:[%s260 + $0x13] sm:$0x1]
        %v1198 = vld [vmem:[%s260 + $0x17] sm:$0x1]
        %v1199 = vld [vmem:[%s260 + $0x1b] sm:$0x1]
        %v1200 = vld [vmem:[%s260 + $0x1f] sm:$0x1]
        %v1201 = vld [vmem:[%s269 + $0x3] sm:$0x1]
        %v1202 = vld [vmem:[%s269 + $0x7] sm:$0x1]
        %v1203 = vld [vmem:[%s269 + $0xb] sm:$0x1]
        %v1204 = vld [vmem:[%s269 + $0xf] sm:$0x1]
        %v1205 = vld [vmem:[%s269 + $0x13] sm:$0x1]
        %v1206 = vld [vmem:[%s269 + $0x17] sm:$0x1]
        %v1207 = vld [vmem:[%s269 + $0x1b] sm:$0x1]
        %v1208 = vld [vmem:[%s269 + $0x1f] sm:$0x1]
        %v1217 = vrot.slane %v1186, 7
        %v1218 = vsel %vm365, %v1217, %v1185
        %v1219 = vrot.slane %v1187, 6
        %v1220 = vsel %vm368, %v1219, %v1218
        %v1221 = vrot.slane %v1188, 5
        %v1222 = vsel %vm371, %v1221, %v1220
        %v1223 = vrot.slane %v1189, 4
        %v1224 = vsel %vm374, %v1223, %v1222
        %v1225 = vrot.slane %v1190, 3
        %v1226 = vsel %vm377, %v1225, %v1224
        %v1227 = vrot.slane %v1191, 2
        %v1228 = vsel %vm380, %v1227, %v1226
        %v1229 = vrot.slane %v1192, 1
        %v1230 = vsel %vm383, %v1229, %v1228
        %v1239 = vrot.slane %v1194, 7
        %v1240 = vsel %vm365, %v1239, %v1193
        %v1241 = vrot.slane %v1195, 6
        %v1242 = vsel %vm368, %v1241, %v1240
        %v1243 = vrot.slane %v1196, 5
        %v1244 = vsel %vm371, %v1243, %v1242
        %v1245 = vrot.slane %v1197, 4
        %v1246 = vsel %vm374, %v1245, %v1244
        %v1247 = vrot.slane %v1198, 3
        %v1248 = vsel %vm377, %v1247, %v1246
        %v1249 = vrot.slane %v1199, 2
        %v1250 = vsel %vm380, %v1249, %v1248
        %v1251 = vrot.slane %v1200, 1
        %v1252 = vsel %vm383, %v1251, %v1250
        %v1253 = vsel %vm407, %v1230, 0
        %v1255 = vsel %vm407, %v1252, 0
        %1257 = vmatprep.subr.mxu0 0.0
        %1258 = vmatpush1.xpose.msra.mxu0 0.0
        %1259 = vmatprep.subr.mxu0 0.0
        %1260 = vmatpush1.xpose.msra.mxu0 0.0
        %1261 = vmatprep.subr.mxu0 0.0
        %1262 = vmatpush1.xpose.msra.mxu0 0.0
        %1263 = vmatprep.subr.mxu0 0.0
        %1264 = vmatpush1.xpose.msra.mxu0 0.0
        %1265 = vmatprep.subr.mxu0 0.0
        %1266 = vmatpush1.xpose.msra.mxu0 0.0
        %1267 = vmatprep.subr.mxu0 0.0
        %1268 = vmatpush1.xpose.msra.mxu0 0.0
        %1269 = vmatprep.subr.mxu0 0.0
        %1270 = vmatpush1.xpose.msra.mxu0 0.0
        %1271 = vmatprep.subr.mxu0 0.0
        %1272 = vmatpush1.xpose.msra.mxu0 0.0
        %1273 = vmatprep.subr.mxu0 0.0
        %1274 = vmatpush1.xpose.msra.mxu0 0.0
        %1275 = vmatprep.subr.mxu0 0.0
        %1276 = vmatpush1.xpose.msra.mxu0 0.0
        %1277 = vmatprep.subr.mxu0 0.0
        %1278 = vmatpush1.xpose.msra.mxu0 0.0
        %1279 = vmatprep.subr.mxu0 0.0
        %1280 = vmatpush1.xpose.msra.mxu0 0.0
        %1281 = vmatprep.subr.mxu0 0.0
        %1282 = vmatpush1.xpose.msra.mxu0 0.0
        %1283 = vmatprep.subr.mxu0 0.0
        %1284 = vmatpush1.xpose.msra.mxu0 0.0
        %1285 = vmatprep.subr.mxu0 0.0
        %1286 = vmatpush1.xpose.msra.mxu0 0.0
        %1287 = vmatprep.subr.mxu0 0.0
        %1288 = vmatpush1.xpose.msra.mxu0 %v1255
        %1289 = vmatprep.subr.mxu0 0.0
        %1290 = vmatpush2.xpose.msra.mxu0 0.0
        %1291 = vmatprep.subr.mxu0 0.0
        %1292 = vmatpush2.xpose.msra.mxu0 0.0
        %1293 = vmatprep.subr.mxu0 0.0
        %1294 = vmatpush2.xpose.msra.mxu0 0.0
        %1295 = vmatprep.subr.mxu0 0.0
        %1296 = vmatpush2.xpose.msra.mxu0 0.0
        %1297 = vmatprep.subr.mxu0 0.0
        %1298 = vmatpush2.xpose.msra.mxu0 0.0
        %1299 = vmatprep.subr.mxu0 0.0
        %1300 = vmatpush2.xpose.msra.mxu0 0.0
        %1301 = vmatprep.subr.mxu0 0.0
        %1302 = vmatpush2.xpose.msra.mxu0 0.0
        %1303 = vmatprep.subr.mxu0 0.0
        %1304 = vmatpush2.xpose.msra.mxu0 0.0
        %1305 = vmatprep.subr.mxu0 0.0
        %1306 = vmatpush2.xpose.msra.mxu0 0.0
        %1307 = vmatprep.subr.mxu0 0.0
        %1308 = vmatpush2.xpose.msra.mxu0 0.0
        %1309 = vmatprep.subr.mxu0 0.0
        %1310 = vmatpush2.xpose.msra.mxu0 0.0
        %1311 = vmatprep.subr.mxu0 0.0
        %1312 = vmatpush2.xpose.msra.mxu0 0.0
        %1313 = vmatprep.subr.mxu0 0.0
        %1314 = vmatpush2.xpose.msra.mxu0 0.0
        %1315 = vmatprep.subr.mxu0 0.0
        %1316 = vmatpush2.xpose.msra.mxu0 0.0
        %1317 = vmatprep.subr.mxu0 0.0
        %1318 = vmatpush2.xpose.msra.mxu0 0.0
        %1319 = vmatprep.subr.mxu0 0.0
        %1320 = vmatpush2.xpose.msra.mxu0 0.0
        %1321 = vmatprep.mubr.f32.mxu0 0.0
        %1322 = vmatmul.mubr.f32.gmra.mxu0 %v1253
        %v1323 = vpop.f32.mrf.mxu0
        %v1324 = vadd.f32 0.0, %v1323
        %v1325 = vpop.f32.mrf.mxu0
        %1326 = vdwg.mxu0
        %s1327 = scalar_lea.vmem [#allocation2], 24
        %v1328 = vld [vmem:[%s1327] sm:$0xff]
        %v1329 = vsel %vm483, %v1324, -inf
        %1330 = vmax.xlane.f32.xlu0 %v1329
        %v1331 = vpop.xlane.xlu0 %1330
        %v1332 = vmax.f32 %v1328, %v1331
        %v1333 = vsub.f32 %v1328, %v1332
        %v1334 = vmul.f32 %v1333, 1.442695
        %v1335 = vpow.pop %v1334
        %1337 = vset.pattern.permute.xlu0 0
        %1338 = vperm.xlu0 %1337, %v1332
        %v1339 = vpop.permute.xlu0 %1338
        %v1341 = vsub.f32 %v1324, %v1339
        %v1342 = vmul.f32 %v1341, 1.442695
        %v1343 = vpow.pop %v1342
        %s1344 = scalar_lea.vmem [#allocation3], 24
        %v1345 = vld [vmem:[%s1344] sm:$0xff]
        %v1346 = vmul.f32 %v1335, %v1345
        %v1347 = vsel %vm483, %v1343, 0.0
        %1348 = vadd.xlane.f32.xlu0 %v1347
        %v1349 = vpop.xlane.xlu0 %1348
        %v1350 = vadd.f32 %v1346, %v1349
        %1351 = vst.msk [vmem:[%s1344] sm:$0xff] %vm505, %v1350
        %s1352 = scalar_lea.vmem [#allocation4], 24
        %v1353 = vld [vmem:[%s1352] sm:$0xff]
        %1355 = vset.pattern.permute.xlu0 0
        %1356 = vperm.xlu0 %1355, %v1335
        %v1357 = vpop.permute.xlu0 %1356
        %v1359 = vmul.f32 %v1357, %v1353
        %v1368 = vrot.slane %v1202, 7
        %v1369 = vsel %vm365, %v1368, %v1201
        %v1370 = vrot.slane %v1203, 6
        %v1371 = vsel %vm368, %v1370, %v1369
        %v1372 = vrot.slane %v1204, 5
        %v1373 = vsel %vm371, %v1372, %v1371
        %v1374 = vrot.slane %v1205, 4
        %v1375 = vsel %vm374, %v1374, %v1373
        %v1376 = vrot.slane %v1206, 3
        %v1377 = vsel %vm377, %v1376, %v1375
        %v1378 = vrot.slane %v1207, 2
        %v1379 = vsel %vm380, %v1378, %v1377
        %v1380 = vrot.slane %v1208, 1
        %v1381 = vsel %vm383, %v1380, %v1379
        %v1384 = vsel %vm483, %v1343, 0
        %1386 = vmatprep.subr.mxu0 0.0
        %1387 = vmatpush1.msra.mxu0 0.0
        %1388 = vmatprep.subr.mxu0 0.0
        %1389 = vmatpush1.msra.mxu0 0.0
        %1390 = vmatprep.subr.mxu0 0.0
        %1391 = vmatpush1.msra.mxu0 0.0
        %1392 = vmatprep.subr.mxu0 0.0
        %1393 = vmatpush1.msra.mxu0 0.0
        %1394 = vmatprep.subr.mxu0 0.0
        %1395 = vmatpush1.msra.mxu0 0.0
        %1396 = vmatprep.subr.mxu0 0.0
        %1397 = vmatpush1.msra.mxu0 0.0
        %1398 = vmatprep.subr.mxu0 0.0
        %1399 = vmatpush1.msra.mxu0 0.0
        %1400 = vmatprep.subr.mxu0 0.0
        %1401 = vmatpush1.msra.mxu0 0.0
        %1402 = vmatprep.subr.mxu0 0.0
        %1403 = vmatpush1.msra.mxu0 0.0
        %1404 = vmatprep.subr.mxu0 0.0
        %1405 = vmatpush1.msra.mxu0 0.0
        %1406 = vmatprep.subr.mxu0 0.0
        %1407 = vmatpush1.msra.mxu0 0.0
        %1408 = vmatprep.subr.mxu0 0.0
        %1409 = vmatpush1.msra.mxu0 0.0
        %1410 = vmatprep.subr.mxu0 0.0
        %1411 = vmatpush1.msra.mxu0 0.0
        %1412 = vmatprep.subr.mxu0 0.0
        %1413 = vmatpush1.msra.mxu0 0.0
        %1414 = vmatprep.subr.mxu0 0.0
        %1415 = vmatpush1.msra.mxu0 0.0
        %1416 = vmatprep.subr.mxu0 0.0
        %1417 = vmatpush1.msra.mxu0 %v1381
        %1418 = vmatprep.subr.mxu0 0.0
        %1419 = vmatpush2.msra.mxu0 0.0
        %1420 = vmatprep.subr.mxu0 0.0
        %1421 = vmatpush2.msra.mxu0 0.0
        %1422 = vmatprep.subr.mxu0 0.0
        %1423 = vmatpush2.msra.mxu0 0.0
        %1424 = vmatprep.subr.mxu0 0.0
        %1425 = vmatpush2.msra.mxu0 0.0
        %1426 = vmatprep.subr.mxu0 0.0
        %1427 = vmatpush2.msra.mxu0 0.0
        %1428 = vmatprep.subr.mxu0 0.0
        %1429 = vmatpush2.msra.mxu0 0.0
        %1430 = vmatprep.subr.mxu0 0.0
        %1431 = vmatpush2.msra.mxu0 0.0
        %1432 = vmatprep.subr.mxu0 0.0
        %1433 = vmatpush2.msra.mxu0 0.0
        %1434 = vmatprep.subr.mxu0 0.0
        %1435 = vmatpush2.msra.mxu0 0.0
        %1436 = vmatprep.subr.mxu0 0.0
        %1437 = vmatpush2.msra.mxu0 0.0
        %1438 = vmatprep.subr.mxu0 0.0
        %1439 = vmatpush2.msra.mxu0 0.0
        %1440 = vmatprep.subr.mxu0 0.0
        %1441 = vmatpush2.msra.mxu0 0.0
        %1442 = vmatprep.subr.mxu0 0.0
        %1443 = vmatpush2.msra.mxu0 0.0
        %1444 = vmatprep.subr.mxu0 0.0
        %1445 = vmatpush2.msra.mxu0 0.0
        %1446 = vmatprep.subr.mxu0 0.0
        %1447 = vmatpush2.msra.mxu0 0.0
        %1448 = vmatprep.subr.mxu0 0.0
        %1449 = vmatpush2.msra.mxu0 0.0
        %1450 = vmatprep.mubr.f32.mxu0 0.0
        %1451 = vmatmul.mubr.f32.gmra.mxu0 %v1384
        %v1452 = vpop.f32.mrf.mxu0
        %v1453 = vadd.f32 0.0, %v1452
        %v1454 = vpop.f32.mrf.mxu0
        %1455 = vdwg.mxu0
        %v1456 = vadd.f32 %v1359, %v1453
        %1457 = vst.msk [vmem:[%s1352] sm:$0xff] %vm407, %v1456
        %1458 = vst.msk [vmem:[%s1327] sm:$0xff] %vm505, %v1332
        // Predicated region
        $region49: #{tpu_custom_call.1} parent=31 // pred_check
          %p1459 = pneg %p306
        $region50: #{tpu_custom_call.1} parent=31 // pred_check_branch
          %1461 = sbr.rel (%p1459) target = $region52
        $region51: #{tpu_custom_call.1} parent=31 // pred_region
          %v1462 = vld [vmem:[#allocation3] sm:$0xff]
          %v1463 = vrcp.pop %v1462
          %v1464 = vld [vmem:[#allocation4] sm:$0xff]
          %1466 = vset.pattern.permute.xlu0 0
          %1467 = vperm.xlu0 %1466, %v1463
          %v1468 = vpop.permute.xlu0 %1467
          %v1470 = vmul.f32 %v1464, %v1468
          %v1472 = vcombine.high %v1470, %v1470
          %v1474 = vunpack.c.l.s4 1966171168
          %v1475 = vunpack.c.0.s8 %v1474
          %v1476 = vlaneseq
          %v1477 = vshrl.u32 %v1476, 7
          %v1478 = vsub.s32 %v1475, %v1477
          %v1479 = vrot.slane %v1470, %v1478
          %v1481 = vunpack.c.l.s4 1966171168
          %v1482 = vunpack.c.0.s8 %v1481
          %v1483 = vlaneseq
          %v1484 = vshrl.u32 %v1483, 7
          %v1485 = vsub.s32 %v1482, %v1484
          %v1486 = vrot.slane %v1472, %v1485
          %v1487 = vcombine.high %v1479, %v1479
          %v1488 = vcombine.high %v1486, %v1486
          %v1490 = vunpack.c.l.s4 1966171168
          %v1491 = vunpack.c.0.s8 %v1490
          %v1492 = vlaneseq
          %v1493 = vshrl.u32 %v1492, 7
          %v1494 = vsub.s32 %v1491, %v1493
          %v1495 = vrot.slane %v1479, %v1494
          %v1497 = vunpack.c.l.s4 1966171168
          %v1498 = vunpack.c.0.s8 %v1497
          %v1499 = vlaneseq
          %v1500 = vshrl.u32 %v1499, 7
          %v1501 = vsub.s32 %v1498, %v1500
          %v1502 = vrot.slane %v1486, %v1501
          %v1504 = vunpack.c.l.s4 1966171168
          %v1505 = vunpack.c.0.s8 %v1504
          %v1506 = vlaneseq
          %v1507 = vshrl.u32 %v1506, 7
          %v1508 = vsub.s32 %v1505, %v1507
          %v1509 = vrot.slane %v1487, %v1508
          %v1511 = vunpack.c.l.s4 1966171168
          %v1512 = vunpack.c.0.s8 %v1511
          %v1513 = vlaneseq
          %v1514 = vshrl.u32 %v1513, 7
          %v1515 = vsub.s32 %v1512, %v1514
          %v1516 = vrot.slane %v1488, %v1515
          %v1517 = vcombine.high %v1495, %v1495
          %v1518 = vcombine.high %v1502, %v1502
          %v1519 = vcombine.high %v1509, %v1509
          %v1520 = vcombine.high %v1516, %v1516
          %vm1529 = vcmask 253952
          %1530 = vst.msk [vmem:[%s301] sm:$0x1] %vm1529, %v1495
          %1531 = vst.msk [vmem:[%s301 + $0x4] sm:$0x1] %vm1529, %v1509
          %1532 = vst.msk [vmem:[%s301 + $0x8] sm:$0x1] %vm1529, %v1517
          %1533 = vst.msk [vmem:[%s301 + $0xc] sm:$0x1] %vm1529, %v1519
          %1534 = vst.msk [vmem:[%s301 + $0x10] sm:$0x1] %vm1529, %v1502
          %1535 = vst.msk [vmem:[%s301 + $0x14] sm:$0x1] %vm1529, %v1516
          %1536 = vst.msk [vmem:[%s301 + $0x18] sm:$0x1] %vm1529, %v1518
          %1537 = vst.msk [vmem:[%s301 + $0x1c] sm:$0x1] %vm1529, %v1520
          %v1538 = vld [vmem:[%s780] sm:$0xff]
          %v1539 = vrcp.pop %v1538
          %v1540 = vld [vmem:[%s788] sm:$0xff]
          %1542 = vset.pattern.permute.xlu0 0
          %1543 = vperm.xlu0 %1542, %v1539
          %v1544 = vpop.permute.xlu0 %1543
          %v1546 = vmul.f32 %v1540, %v1544
          %v1548 = vcombine.high %v1546, %v1546
          %v1550 = vunpack.c.l.s4 1966171168
          %v1551 = vunpack.c.0.s8 %v1550
          %v1552 = vlaneseq
          %v1553 = vshrl.u32 %v1552, 7
          %v1554 = vsub.s32 %v1551, %v1553
          %v1555 = vrot.slane %v1546, %v1554
          %v1557 = vunpack.c.l.s4 1966171168
          %v1558 = vunpack.c.0.s8 %v1557
          %v1559 = vlaneseq
          %v1560 = vshrl.u32 %v1559, 7
          %v1561 = vsub.s32 %v1558, %v1560
          %v1562 = vrot.slane %v1548, %v1561
          %v1563 = vcombine.high %v1555, %v1555
          %v1564 = vcombine.high %v1562, %v1562
          %v1566 = vunpack.c.l.s4 1966171168
          %v1567 = vunpack.c.0.s8 %v1566
          %v1568 = vlaneseq
          %v1569 = vshrl.u32 %v1568, 7
          %v1570 = vsub.s32 %v1567, %v1569
          %v1571 = vrot.slane %v1555, %v1570
          %v1573 = vunpack.c.l.s4 1966171168
          %v1574 = vunpack.c.0.s8 %v1573
          %v1575 = vlaneseq
          %v1576 = vshrl.u32 %v1575, 7
          %v1577 = vsub.s32 %v1574, %v1576
          %v1578 = vrot.slane %v1562, %v1577
          %v1580 = vunpack.c.l.s4 1966171168
          %v1581 = vunpack.c.0.s8 %v1580
          %v1582 = vlaneseq
          %v1583 = vshrl.u32 %v1582, 7
          %v1584 = vsub.s32 %v1581, %v1583
          %v1585 = vrot.slane %v1563, %v1584
          %v1587 = vunpack.c.l.s4 1966171168
          %v1588 = vunpack.c.0.s8 %v1587
          %v1589 = vlaneseq
          %v1590 = vshrl.u32 %v1589, 7
          %v1591 = vsub.s32 %v1588, %v1590
          %v1592 = vrot.slane %v1564, %v1591
          %v1593 = vcombine.high %v1571, %v1571
          %v1594 = vcombine.high %v1578, %v1578
          %v1595 = vcombine.high %v1585, %v1585
          %v1596 = vcombine.high %v1592, %v1592
          %1605 = vst.msk [vmem:[%s301 + $0x1] sm:$0x1] %vm1529, %v1571
          %1606 = vst.msk [vmem:[%s301 + $0x5] sm:$0x1] %vm1529, %v1585
          %1607 = vst.msk [vmem:[%s301 + $0x9] sm:$0x1] %vm1529, %v1593
          %1608 = vst.msk [vmem:[%s301 + $0xd] sm:$0x1] %vm1529, %v1595
          %1609 = vst.msk [vmem:[%s301 + $0x11] sm:$0x1] %vm1529, %v1578
          %1610 = vst.msk [vmem:[%s301 + $0x15] sm:$0x1] %vm1529, %v1592
          %1611 = vst.msk [vmem:[%s301 + $0x19] sm:$0x1] %vm1529, %v1594
          %1612 = vst.msk [vmem:[%s301 + $0x1d] sm:$0x1] %vm1529, %v1596
          %v1613 = vld [vmem:[%s1062] sm:$0xff]
          %v1614 = vrcp.pop %v1613
          %v1615 = vld [vmem:[%s1070] sm:$0xff]
          %1617 = vset.pattern.permute.xlu0 0
          %1618 = vperm.xlu0 %1617, %v1614
          %v1619 = vpop.permute.xlu0 %1618
          %v1621 = vmul.f32 %v1615, %v1619
          %v1623 = vcombine.high %v1621, %v1621
          %v1625 = vunpack.c.l.s4 1966171168
          %v1626 = vunpack.c.0.s8 %v1625
          %v1627 = vlaneseq
          %v1628 = vshrl.u32 %v1627, 7
          %v1629 = vsub.s32 %v1626, %v1628
          %v1630 = vrot.slane %v1621, %v1629
          %v1632 = vunpack.c.l.s4 1966171168
          %v1633 = vunpack.c.0.s8 %v1632
          %v1634 = vlaneseq
          %v1635 = vshrl.u32 %v1634, 7
          %v1636 = vsub.s32 %v1633, %v1635
          %v1637 = vrot.slane %v1623, %v1636
          %v1638 = vcombine.high %v1630, %v1630
          %v1639 = vcombine.high %v1637, %v1637
          %v1641 = vunpack.c.l.s4 1966171168
          %v1642 = vunpack.c.0.s8 %v1641
          %v1643 = vlaneseq
          %v1644 = vshrl.u32 %v1643, 7
          %v1645 = vsub.s32 %v1642, %v1644
          %v1646 = vrot.slane %v1630, %v1645
          %v1648 = vunpack.c.l.s4 1966171168
          %v1649 = vunpack.c.0.s8 %v1648
          %v1650 = vlaneseq
          %v1651 = vshrl.u32 %v1650, 7
          %v1652 = vsub.s32 %v1649, %v1651
          %v1653 = vrot.slane %v1637, %v1652
          %v1655 = vunpack.c.l.s4 1966171168
          %v1656 = vunpack.c.0.s8 %v1655
          %v1657 = vlaneseq
          %v1658 = vshrl.u32 %v1657, 7
          %v1659 = vsub.s32 %v1656, %v1658
          %v1660 = vrot.slane %v1638, %v1659
          %v1662 = vunpack.c.l.s4 1966171168
          %v1663 = vunpack.c.0.s8 %v1662
          %v1664 = vlaneseq
          %v1665 = vshrl.u32 %v1664, 7
          %v1666 = vsub.s32 %v1663, %v1665
          %v1667 = vrot.slane %v1639, %v1666
          %v1668 = vcombine.high %v1646, %v1646
          %v1669 = vcombine.high %v1653, %v1653
          %v1670 = vcombine.high %v1660, %v1660
          %v1671 = vcombine.high %v1667, %v1667
          %1680 = vst.msk [vmem:[%s301 + $0x2] sm:$0x1] %vm1529, %v1646
          %1681 = vst.msk [vmem:[%s301 + $0x6] sm:$0x1] %vm1529, %v1660
          %1682 = vst.msk [vmem:[%s301 + $0xa] sm:$0x1] %vm1529, %v1668
          %1683 = vst.msk [vmem:[%s301 + $0xe] sm:$0x1] %vm1529, %v1670
          %1684 = vst.msk [vmem:[%s301 + $0x12] sm:$0x1] %vm1529, %v1653
          %1685 = vst.msk [vmem:[%s301 + $0x16] sm:$0x1] %vm1529, %v1667
          %1686 = vst.msk [vmem:[%s301 + $0x1a] sm:$0x1] %vm1529, %v1669
          %1687 = vst.msk [vmem:[%s301 + $0x1e] sm:$0x1] %vm1529, %v1671
          %v1688 = vld [vmem:[%s1344] sm:$0xff]
          %v1689 = vrcp.pop %v1688
          %v1690 = vld [vmem:[%s1352] sm:$0xff]
          %1692 = vset.pattern.permute.xlu0 0
          %1693 = vperm.xlu0 %1692, %v1689
          %v1694 = vpop.permute.xlu0 %1693
          %v1696 = vmul.f32 %v1690, %v1694
          %v1698 = vcombine.high %v1696, %v1696
          %v1700 = vunpack.c.l.s4 1966171168
          %v1701 = vunpack.c.0.s8 %v1700
          %v1702 = vlaneseq
          %v1703 = vshrl.u32 %v1702, 7
          %v1704 = vsub.s32 %v1701, %v1703
          %v1705 = vrot.slane %v1696, %v1704
          %v1707 = vunpack.c.l.s4 1966171168
          %v1708 = vunpack.c.0.s8 %v1707
          %v1709 = vlaneseq
          %v1710 = vshrl.u32 %v1709, 7
          %v1711 = vsub.s32 %v1708, %v1710
          %v1712 = vrot.slane %v1698, %v1711
          %v1713 = vcombine.high %v1705, %v1705
          %v1714 = vcombine.high %v1712, %v1712
          %v1716 = vunpack.c.l.s4 1966171168
          %v1717 = vunpack.c.0.s8 %v1716
          %v1718 = vlaneseq
          %v1719 = vshrl.u32 %v1718, 7
          %v1720 = vsub.s32 %v1717, %v1719
          %v1721 = vrot.slane %v1705, %v1720
          %v1723 = vunpack.c.l.s4 1966171168
          %v1724 = vunpack.c.0.s8 %v1723
          %v1725 = vlaneseq
          %v1726 = vshrl.u32 %v1725, 7
          %v1727 = vsub.s32 %v1724, %v1726
          %v1728 = vrot.slane %v1712, %v1727
          %v1730 = vunpack.c.l.s4 1966171168
          %v1731 = vunpack.c.0.s8 %v1730
          %v1732 = vlaneseq
          %v1733 = vshrl.u32 %v1732, 7
          %v1734 = vsub.s32 %v1731, %v1733
          %v1735 = vrot.slane %v1713, %v1734
          %v1737 = vunpack.c.l.s4 1966171168
          %v1738 = vunpack.c.0.s8 %v1737
          %v1739 = vlaneseq
          %v1740 = vshrl.u32 %v1739, 7
          %v1741 = vsub.s32 %v1738, %v1740
          %v1742 = vrot.slane %v1714, %v1741
          %v1743 = vcombine.high %v1721, %v1721
          %v1744 = vcombine.high %v1728, %v1728
          %v1745 = vcombine.high %v1735, %v1735
          %v1746 = vcombine.high %v1742, %v1742
          %1755 = vst.msk [vmem:[%s301 + $0x3] sm:$0x1] %vm1529, %v1721
          %1756 = vst.msk [vmem:[%s301 + $0x7] sm:$0x1] %vm1529, %v1735
          %1757 = vst.msk [vmem:[%s301 + $0xb] sm:$0x1] %vm1529, %v1743
          %1758 = vst.msk [vmem:[%s301 + $0xf] sm:$0x1] %vm1529, %v1745
          %1759 = vst.msk [vmem:[%s301 + $0x13] sm:$0x1] %vm1529, %v1728
          %1760 = vst.msk [vmem:[%s301 + $0x17] sm:$0x1] %vm1529, %v1742
          %1761 = vst.msk [vmem:[%s301 + $0x1b] sm:$0x1] %vm1529, %v1744
          %1762 = vst.msk [vmem:[%s301 + $0x1f] sm:$0x1] %vm1529, %v1746
        $region52: #{tpu_custom_call.1} parent=31 // pred_fallthru
          _
        %s1763 = sand.u32 %s136, 1
        %s1764 = scalar_lea.sflag [#allocation7], %s1763
        %s1765 = sand.u32 %s136, 1
        %s1766 = smul.addr %s1765, 32
        %s1767 = scalar_lea.vmem [#allocation11], %s1766
        // Predicated region
        $region53: #{tpu_custom_call.1} parent=31 // pred_check
          %p1768 = pneg %p146
        $region54: #{tpu_custom_call.1} parent=31 // pred_check_branch
          %1770 = sbr.rel (%p1768) target = $region56
        $region55: #{tpu_custom_call.1} parent=31 // pred_region
          %s1771 = smul.u32 8, %s29
          %s1773 = ssub.s32 512, 512
          %1774 = vsyncadd %s1764, %s1773
          %s1775 = smul.addr %s28, 8
          %s1776 = sadd.s32 %s1771, %s1775
          %s1777 = smul.addr %s1776, 64
          %s1778 = scalar_lea.hbm %s3, %s1777
          %s1779 = sshll.u32 %s1767, 4
          %s1780 = int_to_ptr.vmem [resolvable:$true] %s1779
          %1785 = dma.vmem_to_hbm [thread:$0]  %s1780, 512, %s1778, %s1764, 64, 64, 4
        $region56: #{tpu_custom_call.1} parent=31 // pred_fallthru
          _
      $region32: #{tpu_custom_call.1} parent=5 // pred_fallthru
        _
      %p1786 = scmp.le.s32.totalorder 2, %s18
      // Predicated region
      $region57: #{tpu_custom_call.1} parent=5 // pred_check
        %p1787 = pneg %p1786
      $region58: #{tpu_custom_call.1} parent=5 // pred_check_branch
        %1789 = sbr.rel (%p1787) target = $region60
      $region59: #{tpu_custom_call.1} parent=5 // pred_region
        %s1790 = ssub.s32 %s18, 2
        // Predicated region
        $region61: #{tpu_custom_call.1} parent=59 // pred_check
          %p1791 = pneg %p152
        $region62: #{tpu_custom_call.1} parent=59 // pred_check_branch
          %1793 = sbr.rel (%p1791) target = $region64
        $region63: #{tpu_custom_call.1} parent=59 // pred_region
          %s1794 = sand.u32 %s137, 1
          %s1795 = scalar_lea.sflag [#allocation7], %s1794
          %s1796 = sand.u32 %s137, 1
          %s1797 = smul.addr %s1796, 32
          %s1798 = scalar_lea.vmem [#allocation11], %s1797
          %1799 = dma.done %s1795, 512
        $region64: #{tpu_custom_call.1} parent=59 // pred_fallthru
          _
      $region60: #{tpu_custom_call.1} parent=5 // pred_fallthru
        _
    $region6: #{tpu_custom_call.1} parent=1 // loop_footer
      %s22 = sadd.s32 1, %s18
    $region7: #{tpu_custom_call.1} parent=1 // loop_footer_branch
      %17 = sbr.rel target = $region3
    $region8: #{tpu_custom_call.1} parent=1 // loop_exit
      _
    %1800 = vsyncpa [#allocation6], 1
    %s1801 = scalar_lea.sflag [#allocation6], 1
    %1802 = vsyncpa %s1801, 1
    %1803 = vsyncpa [#allocation9], 1
    %s1804 = scalar_lea.sflag [#allocation9], 1
    %1805 = vsyncpa %s1804, 1
    %1806 = vsyncpa [#allocation7], 1
    %s1807 = scalar_lea.sflag [#allocation7], 1
    %1808 = vsyncpa %s1807, 1

</llo_original>
